<compile_context>
chip_gen: v7x
topology: tpu7x:2x2x1
jax: 0.10.0
libtpu: 0.0.40
codegen_flags: <defaults>
</compile_context>

<pallas_src>
import jax
import jax.numpy as jnp
from jax.experimental import pallas as pl
from jax.experimental.pallas import tpu as pltpu


# ---------------------------------------------------------------------------
# Fused kernel: chunk-level input projection + serial GRU recurrence.
# ---------------------------------------------------------------------------
def _gru_fused_kernel(x_ref, wi_ref, bi_ref, wh_ref, bhn_ref, out_ref, h_ref, gi_ref):
    """One (batch-tile, time-chunk) grid step.

    x_ref   : (BB, TC, E)   bf16 input chunk
    wi_ref  : (E, 3*Hp)     bf16 fused input weights  [W_ir | W_iz | W_in] (gate-padded)
    bi_ref  : (1, 3*Hp)     f32  fused bias: [b_ir+b_hr | b_iz+b_hz | b_in]
    wh_ref  : (Hp, 3*Hp)    bf16 fused hidden weights [W_hr | W_hz | W_hn]
    bhn_ref : (1, Hp)       f32  hidden-side new-gate bias b_hn
    out_ref : (BB, TC, Hp)  f32  hidden states for this chunk
    h_ref   : (BB, Hp)      f32  VMEM scratch: carried hidden state
    gi_ref  : (BB, TC, 3Hp) f32  VMEM scratch: input-side gate pre-activations
    """
    c = pl.program_id(1)                       # time-chunk index (sequential axis)

    BB, TC, _ = x_ref.shape
    Hp = h_ref.shape[-1]

    @pl.when(c == 0)
    def _init():
        # init_lstm_states: zeros(1, batch, hidden)
        h_ref[...] = jnp.zeros_like(h_ref)

    # ---- chunk-level input projection (MXU is otherwise idle during recurrence) ----
    # Unrolled over the small batch-block dim to keep every matmul a plain 2-D dot.
    for bb in range(BB):
        gi_ref[bb] = (
            jnp.dot(x_ref[bb], wi_ref[...], preferred_element_type=jnp.float32)
            + bi_ref[...]
        )

    # Hoisted hidden-side "new"-gate bias broadcast (only b_hn must stay hidden-side).
    bhn = jnp.broadcast_to(bhn_ref[...], (BB, Hp))

    h = h_ref[...]                             # (BB, Hp) f32, carried in vregs
    for i in range(TC):                        # statically unrolled serial recurrence
        gi_t = gi_ref[:, i, :]                 # per-step vld from VMEM scratch
        gh = jnp.dot(h.astype(wh_ref.dtype), wh_ref[...],
                     preferred_element_type=jnp.float32)        # (BB, 3Hp)
        r = jax.nn.sigmoid(gi_t[:, 0:Hp] + gh[:, 0:Hp])
        z = jax.nn.sigmoid(gi_t[:, Hp:2 * Hp] + gh[:, Hp:2 * Hp])
        n = jnp.tanh(gi_t[:, 2 * Hp:] + r * (gh[:, 2 * Hp:] + bhn))
        h = n + z * (h - n)                    # == (1-z)*n + z*h, one fewer VPU op
        out_ref[:, i, :] = h.astype(out_ref.dtype)

    h_ref[...] = h


# ---------------------------------------------------------------------------
# Sizing helpers
# ---------------------------------------------------------------------------
def _round_up(x, m):
    return (x + m - 1) // m * m


def _pick_time_chunk(b_blk, T, E, Hp, budget_bytes=6 * (1 << 20)):
    """Largest time chunk (multiple of 8, capped for unroll size) whose per-step
    working set (double-buffered x/out blocks + gi scratch) fits the VMEM budget."""
    t_pad8 = _round_up(max(T, 1), 8)
    for tc in (64, 32, 16, 8):
        if tc > t_pad8:
            continue
        need = (2 * b_blk * tc * E * 2            # x blocks (bf16, double-buffered)
                + 2 * b_blk * tc * Hp * 4         # out blocks (f32, double-buffered)
                + b_blk * tc * 3 * Hp * 4)        # gi scratch (f32)
        if need <= budget_bytes:
            return tc
    return 8


# ---------------------------------------------------------------------------
# Wrapper
# ---------------------------------------------------------------------------
def gru_encoder_pallas(x_btE, packed):
    """x_btE: (B, T, E) float32 (batch_first, like the PyTorch module).
    Returns gru_out: (B, T, H) float32."""
    B, T, E = x_btE.shape
    H, Hp = packed["H"], packed["Hp"]
    H3p = 3 * Hp
    mxu_dtype = packed["w_i"].dtype

    # Batch split: 2 tiles when possible -> one per TensorCore on v7x ("parallel").
    nb = 2 if (B >= 2 and B % 2 == 0) else 1
    b_blk = B // nb

    TC = _pick_time_chunk(b_blk, T, E, Hp)
    nc = pl.cdiv(T, TC)
    T_pad = nc * TC

    x = x_btE.astype(mxu_dtype)
    if T_pad != T:
        x = jnp.pad(x, ((0, 0), (0, T_pad - T), (0, 0)))

    # Rough VMEM working-set estimate -> explicit limit (v7x only has 64 MiB physical).
    est = (2 * b_blk * TC * E * 2                      # x blocks
           + 2 * b_blk * TC * Hp * 4                   # out blocks
           + 2 * (E * H3p + Hp * H3p) * 2              # resident weights (bf16, x2 bufs)
           + b_blk * TC * H3p * 4                      # gi scratch
           + 8 * Hp * 4 + 2 * (H3p + Hp) * 4)          # h scratch + biases
    vmem_limit = int(min(max(4 * est, 16 << 20), 32 << 20))

    out = pl.pallas_call(
        _gru_fused_kernel,
        out_shape=jax.ShapeDtypeStruct((B, T_pad, Hp), jnp.float32),
        grid_spec=pltpu.PrefetchScalarGridSpec(
            num_scalar_prefetch=0,
            grid=(nb, nc),
            in_specs=[
                pl.BlockSpec((b_blk, TC, E), lambda b, c: (b, c, 0)),   # x chunk
                pl.BlockSpec((E, H3p), lambda b, c: (0, 0)),            # W_i (resident)
                pl.BlockSpec((1, H3p), lambda b, c: (0, 0)),            # fused input bias
                pl.BlockSpec((Hp, H3p), lambda b, c: (0, 0)),           # W_h (resident)
                pl.BlockSpec((1, Hp), lambda b, c: (0, 0)),             # b_hn
            ],
            out_specs=pl.BlockSpec((b_blk, TC, Hp), lambda b, c: (b, c, 0)),
            scratch_shapes=[
                pltpu.VMEM((b_blk, Hp), jnp.float32),                   # hidden state
                pltpu.VMEM((b_blk, TC, H3p), jnp.float32),              # gi chunk
            ],
        ),
        compiler_params=pltpu.CompilerParams(
            dimension_semantics=("parallel", "arbitrary"),              # batch || , time serial
            vmem_limit_bytes=vmem_limit,
        ),
    )(x, packed["w_i"], packed["b_i"], packed["w_h"], packed["b_hn"])

    return out[:, :T, :H]


# ---------------------------------------------------------------------------
# Parameters (PyTorch nn.GRU layout), kernel packing, and pure-JAX reference
# ---------------------------------------------------------------------------
def make_gru_params(key, emb_dim, hidden_dim):
    """nn.GRU-style uniform(-1/sqrt(H), 1/sqrt(H)) init in PyTorch layout."""
    bound = 1.0 / float(hidden_dim) ** 0.5
    k = jax.random.split(key, 4)
    u = lambda kk, shape: jax.random.uniform(
        kk, shape, dtype=jnp.float32, minval=-bound, maxval=bound)
    return {
        "w_ih": u(k[0], (3 * hidden_dim, emb_dim)),   # [W_ir; W_iz; W_in]
        "w_hh": u(k[1], (3 * hidden_dim, hidden_dim)),
        "b_ih": u(k[2], (3 * hidden_dim,)),
        "b_hh": u(k[3], (3 * hidden_dim,)),
    }


def pack_gru_params(params, lane=128, mxu_dtype=jnp.bfloat16):
    """Pack/fuse/pad params for the kernel:
      * gates concatenated along a lane-padded axis (Hp = round_up(H, 128)),
      * hidden-side r/z biases folded into the input-side bias,
      * MXU weights cast to bf16 (f32 accumulation in-kernel)."""
    w_ih, w_hh = params["w_ih"], params["w_hh"]
    b_ih, b_hh = params["b_ih"], params["b_hh"]
    H = w_hh.shape[1]
    E = w_ih.shape[1]
    Hp = _round_up(H, lane)

    wi = jnp.zeros((E, 3 * Hp), jnp.float32)
    wh = jnp.zeros((Hp, 3 * Hp), jnp.float32)
    bi = jnp.zeros((1, 3 * Hp), jnp.float32)
    for g in range(3):
        wi = wi.at[:, g * Hp:g * Hp + H].set(w_ih[g * H:(g + 1) * H, :].T)
        wh = wh.at[:H, g * Hp:g * Hp + H].set(w_hh[g * H:(g + 1) * H, :].T)
        fold = b_ih[g * H:(g + 1) * H]
        if g < 2:                                   # b_hr / b_hz are purely additive
            fold = fold + b_hh[g * H:(g + 1) * H]
        bi = bi.at[0, g * Hp:g * Hp + H].set(fold)
    bhn = jnp.zeros((1, Hp), jnp.float32).at[0, :H].set(b_hh[2 * H:3 * H])

    return {
        "w_i": wi.astype(mxu_dtype),
        "w_h": wh.astype(mxu_dtype),
        "b_i": bi,
        "b_hn": bhn,
        "H": H,
        "Hp": Hp,
    }


def gru_encoder_ref(x, params):
    """Pure-f32 lax.scan reference matching torch.nn.GRU(batch_first=True), h0 = 0."""
    B, T, E = x.shape
    w_ih, w_hh = params["w_ih"], params["w_hh"]
    b_ih, b_hh = params["b_ih"], params["b_hh"]
    H = w_hh.shape[1]
    h0 = jnp.zeros((B, H), jnp.float32)

    def step(h, x_t):
        gi = x_t @ w_ih.T + b_ih
        gh = h @ w_hh.T + b_hh
        r = jax.nn.sigmoid(gi[:, :H] + gh[:, :H])
        z = jax.nn.sigmoid(gi[:, H:2 * H] + gh[:, H:2 * H])
        n = jnp.tanh(gi[:, 2 * H:] + r * gh[:, 2 * H:])
        h_new = (1.0 - z) * n + z * h
        return h_new, h_new

    _, ys = jax.lax.scan(step, h0, jnp.swapaxes(x, 0, 1))
    return jnp.swapaxes(ys, 0, 1)


if __name__ == "__main__":
    # GRUEncoder(emb_dim=16, hidden_dim=32, bidirectional=False, embedding=None)
    # forward(inp) with inp already embedded: (batch=2, seq=8, emb=16) -> (2, 8, 32)
    B, T, E, H = 2, 8, 16, 32

    key = jax.random.PRNGKey(0)
    k_x, k_p = jax.random.split(key)
    x = jax.random.normal(k_x, (B, T, E), dtype=jnp.float32)
    params = make_gru_params(k_p, E, H)
    packed = pack_gru_params(params)

    out = gru_encoder_pallas(x, packed)
    out = jax.block_until_ready(out)

    ref = gru_encoder_ref(x, params)
    assert out.shape == (B, T, H)
    # bf16 MXU operands (f32 accumulation) vs. the pure-f32 reference -> loosened tol.
    assert jnp.allclose(out, ref, atol=2e-2, rtol=2e-2), "Pallas GRU mismatch vs reference"

    print("KERNEL_OK")
</pallas_src>

<mosaic_0001>
module attributes {stable_mosaic.version = 11 : i64} {
  func.func @_gru_fused_kernel(%arg0: i32, %arg1: i32, %arg2: memref<1x8x16xbf16, #tpu.memory_space<vmem>>, %arg3: memref<16x384xbf16, #tpu.memory_space<vmem>>, %arg4: memref<1x384xf32, #tpu.memory_space<vmem>>, %arg5: memref<128x384xbf16, #tpu.memory_space<vmem>>, %arg6: memref<1x128xf32, #tpu.memory_space<vmem>>, %arg7: memref<1x8x128xf32, #tpu.memory_space<vmem>>, %arg8: memref<1x128xf32, #tpu.memory_space<vmem>>, %arg9: memref<1x8x384xf32, #tpu.memory_space<vmem>>) attributes {dimension_semantics = [#tpu.dimension_semantics<parallel>, #tpu.dimension_semantics<arbitrary>], iteration_bounds = array<i64: 2, 1>, scalar_prefetch = 0 : i64, scratch_operands = 2 : i64, tpu.core_type = #tpu.core_type<tc>, window_params = [{transform_indices = @transform_0, window_bounds = array<i64: 1, 8, 16>}, {pipeline_mode = #tpu.pipeline_mode<synchronous>, transform_indices = @transform_1, window_bounds = array<i64: 16, 384>}, {pipeline_mode = #tpu.pipeline_mode<synchronous>, transform_indices = @transform_2, window_bounds = array<i64: 1, 384>}, {pipeline_mode = #tpu.pipeline_mode<synchronous>, transform_indices = @transform_3, window_bounds = array<i64: 128, 384>}, {pipeline_mode = #tpu.pipeline_mode<synchronous>, transform_indices = @transform_4, window_bounds = array<i64: 1, 128>}, {transform_indices = @transform_5, window_bounds = array<i64: 1, 8, 128>}]} {
    %c0_i32 = arith.constant 0 : i32
    %0 = arith.cmpi eq, %arg1, %c0_i32 : i32
    %1 = arith.extui %0 : i1 to i32
    %c0_i32_0 = arith.constant 0 : i32
    %2 = arith.cmpi ne, %1, %c0_i32_0 : i32
    scf.if %2 {
      %cst_97 = arith.constant 0.000000e+00 : f32
      %280 = vector.broadcast %cst_97 : f32 to vector<1x128xf32>
      %c0_98 = arith.constant 0 : index
      %c0_99 = arith.constant 0 : index
      %281 = vector.load %arg8[%c0_98, %c0_99] : memref<1x128xf32, #tpu.memory_space<vmem>>, vector<1x128xf32>
      tpu.vector_store %arg8[%c0_98, %c0_99], %280 {strides = array<i32>} : memref<1x128xf32, #tpu.memory_space<vmem>>, vector<1x128xf32>,
    } else {
    }
    %c0 = arith.constant 0 : index
    %c0_1 = arith.constant 0 : index
    %c0_2 = arith.constant 0 : index
    %3 = vector.load %arg2[%c0, %c0_1, %c0_2] : memref<1x8x16xbf16, #tpu.memory_space<vmem>>, vector<1x8x16xbf16>
    %4 = vector.shape_cast %3 : vector<1x8x16xbf16> to vector<8x16xbf16>
    %c0_3 = arith.constant 0 : index
    %c0_4 = arith.constant 0 : index
    %5 = vector.load %arg3[%c0_3, %c0_4] : memref<16x384xbf16, #tpu.memory_space<vmem>>, vector<16x384xbf16>
    %cst = arith.constant dense<0.000000e+00> : vector<8x384xf32>
    %6 = tpu.matmul %4, %5, %cst {dimension_numbers = #tpu.dot_dimension_numbers<[1], [0], [0], [1], [0, 0, 1, 1], [], []>} : vector<8x16xbf16>, vector<16x384xbf16>, vector<8x384xf32> -> vector<8x384xf32>
    %c0_5 = arith.constant 0 : index
    %c0_6 = arith.constant 0 : index
    %7 = vector.load %arg4[%c0_5, %c0_6] : memref<1x384xf32, #tpu.memory_space<vmem>>, vector<1x384xf32>
    %8 = vector.broadcast %7 : vector<1x384xf32> to vector<8x384xf32>
    %9 = arith.addf %6, %8 : vector<8x384xf32>
    %c0_7 = arith.constant 0 : index
    %c0_8 = arith.constant 0 : index
    %c0_9 = arith.constant 0 : index
    %10 = vector.load %arg9[%c0_7, %c0_8, %c0_9] : memref<1x8x384xf32, #tpu.memory_space<vmem>>, vector<1x8x384xf32>
    %11 = vector.shape_cast %10 : vector<1x8x384xf32> to vector<8x384xf32>
    %12 = vector.shape_cast %9 : vector<8x384xf32> to vector<1x8x384xf32>
    tpu.vector_store %arg9[%c0_7, %c0_8, %c0_9], %12 {strides = array<i32>} : memref<1x8x384xf32, #tpu.memory_space<vmem>>, vector<1x8x384xf32>,
    %c0_10 = arith.constant 0 : index
    %c0_11 = arith.constant 0 : index
    %13 = vector.load %arg6[%c0_10, %c0_11] : memref<1x128xf32, #tpu.memory_space<vmem>>, vector<1x128xf32>
    %c0_12 = arith.constant 0 : index
    %c0_13 = arith.constant 0 : index
    %14 = vector.load %arg8[%c0_12, %c0_13] : memref<1x128xf32, #tpu.memory_space<vmem>>, vector<1x128xf32>
    %c0_14 = arith.constant 0 : index
    %c0_15 = arith.constant 0 : index
    %c0_16 = arith.constant 0 : index
    %15 = vector.load %arg9[%c0_14, %c0_15, %c0_16] : memref<1x8x384xf32, #tpu.memory_space<vmem>>, vector<1x1x384xf32>
    %16 = vector.shape_cast %15 : vector<1x1x384xf32> to vector<1x384xf32>
    %17 = arith.truncf %14 : vector<1x128xf32> to vector<1x128xbf16>
    %c0_17 = arith.constant 0 : index
    %c0_18 = arith.constant 0 : index
    %18 = vector.load %arg5[%c0_17, %c0_18] : memref<128x384xbf16, #tpu.memory_space<vmem>>, vector<128x384xbf16>
    %cst_19 = arith.constant dense<0.000000e+00> : vector<1x384xf32>
    %19 = tpu.matmul %17, %18, %cst_19 {dimension_numbers = #tpu.dot_dimension_numbers<[1], [0], [0], [1], [0, 0, 1, 1], [], []>} : vector<1x128xbf16>, vector<128x384xbf16>, vector<1x384xf32> -> vector<1x384xf32>
    %20 = vector.extract_strided_slice %16 {offsets = [0, 0], sizes = [1, 128], strides = [1, 1]} : vector<1x384xf32> to vector<1x128xf32>
    %21 = vector.extract_strided_slice %19 {offsets = [0, 0], sizes = [1, 128], strides = [1, 1]} : vector<1x384xf32> to vector<1x128xf32>
    %22 = arith.addf %20, %21 : vector<1x128xf32>
    %23 = arith.negf %22 : vector<1x128xf32>
    %24 = math.exp %23 : vector<1x128xf32>
    %cst_20 = arith.constant 1.000000e+00 : f32
    %25 = vector.broadcast %cst_20 : f32 to vector<1x128xf32>
    %26 = arith.addf %25, %24 : vector<1x128xf32>
    %27 = arith.divf %25, %26 : vector<1x128xf32>
    %28 = vector.extract_strided_slice %16 {offsets = [0, 128], sizes = [1, 128], strides = [1, 1]} : vector<1x384xf32> to vector<1x128xf32>
    %29 = vector.extract_strided_slice %19 {offsets = [0, 128], sizes = [1, 128], strides = [1, 1]} : vector<1x384xf32> to vector<1x128xf32>
    %30 = arith.addf %28, %29 : vector<1x128xf32>
    %31 = arith.negf %30 : vector<1x128xf32>
    %32 = math.exp %31 : vector<1x128xf32>
    %cst_21 = arith.constant 1.000000e+00 : f32
    %33 = vector.broadcast %cst_21 : f32 to vector<1x128xf32>
    %34 = arith.addf %33, %32 : vector<1x128xf32>
    %35 = arith.divf %33, %34 : vector<1x128xf32>
    %36 = vector.extract_strided_slice %16 {offsets = [0, 256], sizes = [1, 128], strides = [1, 1]} : vector<1x384xf32> to vector<1x128xf32>
    %37 = vector.extract_strided_slice %19 {offsets = [0, 256], sizes = [1, 128], strides = [1, 1]} : vector<1x384xf32> to vector<1x128xf32>
    %38 = arith.addf %37, %13 : vector<1x128xf32>
    %39 = arith.mulf %27, %38 : vector<1x128xf32>
    %40 = arith.addf %36, %39 : vector<1x128xf32>
    %41 = math.tanh %40 : vector<1x128xf32>
    %42 = arith.subf %14, %41 : vector<1x128xf32>
    %43 = arith.mulf %35, %42 : vector<1x128xf32>
    %44 = arith.addf %41, %43 : vector<1x128xf32>
    %c0_22 = arith.constant 0 : index
    %c0_23 = arith.constant 0 : index
    %c0_24 = arith.constant 0 : index
    %45 = vector.load %arg7[%c0_22, %c0_23, %c0_24] : memref<1x8x128xf32, #tpu.memory_space<vmem>>, vector<1x1x128xf32>
    %46 = vector.shape_cast %45 : vector<1x1x128xf32> to vector<1x128xf32>
    %47 = vector.shape_cast %44 : vector<1x128xf32> to vector<1x1x128xf32>
    tpu.vector_store %arg7[%c0_22, %c0_23, %c0_24], %47 {strides = array<i32>} : memref<1x8x128xf32, #tpu.memory_space<vmem>>, vector<1x1x128xf32>,
    %c0_25 = arith.constant 0 : index
    %c1 = arith.constant 1 : index
    %c0_26 = arith.constant 0 : index
    %48 = vector.load %arg9[%c0_25, %c1, %c0_26] : memref<1x8x384xf32, #tpu.memory_space<vmem>>, vector<1x1x384xf32>
    %49 = vector.shape_cast %48 : vector<1x1x384xf32> to vector<1x384xf32>
    %50 = arith.truncf %44 : vector<1x128xf32> to vector<1x128xbf16>
    %c0_27 = arith.constant 0 : index
    %c0_28 = arith.constant 0 : index
    %51 = vector.load %arg5[%c0_27, %c0_28] : memref<128x384xbf16, #tpu.memory_space<vmem>>, vector<128x384xbf16>
    %cst_29 = arith.constant dense<0.000000e+00> : vector<1x384xf32>
    %52 = tpu.matmul %50, %51, %cst_29 {dimension_numbers = #tpu.dot_dimension_numbers<[1], [0], [0], [1], [0, 0, 1, 1], [], []>} : vector<1x128xbf16>, vector<128x384xbf16>, vector<1x384xf32> -> vector<1x384xf32>
    %53 = vector.extract_strided_slice %49 {offsets = [0, 0], sizes = [1, 128], strides = [1, 1]} : vector<1x384xf32> to vector<1x128xf32>
    %54 = vector.extract_strided_slice %52 {offsets = [0, 0], sizes = [1, 128], strides = [1, 1]} : vector<1x384xf32> to vector<1x128xf32>
    %55 = arith.addf %53, %54 : vector<1x128xf32>
    %56 = arith.negf %55 : vector<1x128xf32>
    %57 = math.exp %56 : vector<1x128xf32>
    %cst_30 = arith.constant 1.000000e+00 : f32
    %58 = vector.broadcast %cst_30 : f32 to vector<1x128xf32>
    %59 = arith.addf %58, %57 : vector<1x128xf32>
    %60 = arith.divf %58, %59 : vector<1x128xf32>
    %61 = vector.extract_strided_slice %49 {offsets = [0, 128], sizes = [1, 128], strides = [1, 1]} : vector<1x384xf32> to vector<1x128xf32>
    %62 = vector.extract_strided_slice %52 {offsets = [0, 128], sizes = [1, 128], strides = [1, 1]} : vector<1x384xf32> to vector<1x128xf32>
    %63 = arith.addf %61, %62 : vector<1x128xf32>
    %64 = arith.negf %63 : vector<1x128xf32>
    %65 = math.exp %64 : vector<1x128xf32>
    %cst_31 = arith.constant 1.000000e+00 : f32
    %66 = vector.broadcast %cst_31 : f32 to vector<1x128xf32>
    %67 = arith.addf %66, %65 : vector<1x128xf32>
    %68 = arith.divf %66, %67 : vector<1x128xf32>
    %69 = vector.extract_strided_slice %49 {offsets = [0, 256], sizes = [1, 128], strides = [1, 1]} : vector<1x384xf32> to vector<1x128xf32>
    %70 = vector.extract_strided_slice %52 {offsets = [0, 256], sizes = [1, 128], strides = [1, 1]} : vector<1x384xf32> to vector<1x128xf32>
    %71 = arith.addf %70, %13 : vector<1x128xf32>
    %72 = arith.mulf %60, %71 : vector<1x128xf32>
    %73 = arith.addf %69, %72 : vector<1x128xf32>
    %74 = math.tanh %73 : vector<1x128xf32>
    %75 = arith.subf %44, %74 : vector<1x128xf32>
    %76 = arith.mulf %68, %75 : vector<1x128xf32>
    %77 = arith.addf %74, %76 : vector<1x128xf32>
    %c0_32 = arith.constant 0 : index
    %c1_33 = arith.constant 1 : index
    %c0_34 = arith.constant 0 : index
    %78 = vector.load %arg7[%c0_32, %c1_33, %c0_34] : memref<1x8x128xf32, #tpu.memory_space<vmem>>, vector<1x1x128xf32>
    %79 = vector.shape_cast %78 : vector<1x1x128xf32> to vector<1x128xf32>
    %80 = vector.shape_cast %77 : vector<1x128xf32> to vector<1x1x128xf32>
    tpu.vector_store %arg7[%c0_32, %c1_33, %c0_34], %80 {strides = array<i32>} : memref<1x8x128xf32, #tpu.memory_space<vmem>>, vector<1x1x128xf32>,
    %c0_35 = arith.constant 0 : index
    %c2 = arith.constant 2 : index
    %c0_36 = arith.constant 0 : index
    %81 = vector.load %arg9[%c0_35, %c2, %c0_36] : memref<1x8x384xf32, #tpu.memory_space<vmem>>, vector<1x1x384xf32>
    %82 = vector.shape_cast %81 : vector<1x1x384xf32> to vector<1x384xf32>
    %83 = arith.truncf %77 : vector<1x128xf32> to vector<1x128xbf16>
    %c0_37 = arith.constant 0 : index
    %c0_38 = arith.constant 0 : index
    %84 = vector.load %arg5[%c0_37, %c0_38] : memref<128x384xbf16, #tpu.memory_space<vmem>>, vector<128x384xbf16>
    %cst_39 = arith.constant dense<0.000000e+00> : vector<1x384xf32>
    %85 = tpu.matmul %83, %84, %cst_39 {dimension_numbers = #tpu.dot_dimension_numbers<[1], [0], [0], [1], [0, 0, 1, 1], [], []>} : vector<1x128xbf16>, vector<128x384xbf16>, vector<1x384xf32> -> vector<1x384xf32>
    %86 = vector.extract_strided_slice %82 {offsets = [0, 0], sizes = [1, 128], strides = [1, 1]} : vector<1x384xf32> to vector<1x128xf32>
    %87 = vector.extract_strided_slice %85 {offsets = [0, 0], sizes = [1, 128], strides = [1, 1]} : vector<1x384xf32> to vector<1x128xf32>
    %88 = arith.addf %86, %87 : vector<1x128xf32>
    %89 = arith.negf %88 : vector<1x128xf32>
    %90 = math.exp %89 : vector<1x128xf32>
    %cst_40 = arith.constant 1.000000e+00 : f32
    %91 = vector.broadcast %cst_40 : f32 to vector<1x128xf32>
    %92 = arith.addf %91, %90 : vector<1x128xf32>
    %93 = arith.divf %91, %92 : vector<1x128xf32>
    %94 = vector.extract_strided_slice %82 {offsets = [0, 128], sizes = [1, 128], strides = [1, 1]} : vector<1x384xf32> to vector<1x128xf32>
    %95 = vector.extract_strided_slice %85 {offsets = [0, 128], sizes = [1, 128], strides = [1, 1]} : vector<1x384xf32> to vector<1x128xf32>
    %96 = arith.addf %94, %95 : vector<1x128xf32>
    %97 = arith.negf %96 : vector<1x128xf32>
    %98 = math.exp %97 : vector<1x128xf32>
    %cst_41 = arith.constant 1.000000e+00 : f32
    %99 = vector.broadcast %cst_41 : f32 to vector<1x128xf32>
    %100 = arith.addf %99, %98 : vector<1x128xf32>
    %101 = arith.divf %99, %100 : vector<1x128xf32>
    %102 = vector.extract_strided_slice %82 {offsets = [0, 256], sizes = [1, 128], strides = [1, 1]} : vector<1x384xf32> to vector<1x128xf32>
    %103 = vector.extract_strided_slice %85 {offsets = [0, 256], sizes = [1, 128], strides = [1, 1]} : vector<1x384xf32> to vector<1x128xf32>
    %104 = arith.addf %103, %13 : vector<1x128xf32>
    %105 = arith.mulf %93, %104 : vector<1x128xf32>
    %106 = arith.addf %102, %105 : vector<1x128xf32>
    %107 = math.tanh %106 : vector<1x128xf32>
    %108 = arith.subf %77, %107 : vector<1x128xf32>
    %109 = arith.mulf %101, %108 : vector<1x128xf32>
    %110 = arith.addf %107, %109 : vector<1x128xf32>
    %c0_42 = arith.constant 0 : index
    %c2_43 = arith.constant 2 : index
    %c0_44 = arith.constant 0 : index
    %111 = vector.load %arg7[%c0_42, %c2_43, %c0_44] : memref<1x8x128xf32, #tpu.memory_space<vmem>>, vector<1x1x128xf32>
    %112 = vector.shape_cast %111 : vector<1x1x128xf32> to vector<1x128xf32>
    %113 = vector.shape_cast %110 : vector<1x128xf32> to vector<1x1x128xf32>
    tpu.vector_store %arg7[%c0_42, %c2_43, %c0_44], %113 {strides = array<i32>} : memref<1x8x128xf32, #tpu.memory_space<vmem>>, vector<1x1x128xf32>,
    %c0_45 = arith.constant 0 : index
    %c3 = arith.constant 3 : index
    %c0_46 = arith.constant 0 : index
    %114 = vector.load %arg9[%c0_45, %c3, %c0_46] : memref<1x8x384xf32, #tpu.memory_space<vmem>>, vector<1x1x384xf32>
    %115 = vector.shape_cast %114 : vector<1x1x384xf32> to vector<1x384xf32>
    %116 = arith.truncf %110 : vector<1x128xf32> to vector<1x128xbf16>
    %c0_47 = arith.constant 0 : index
    %c0_48 = arith.constant 0 : index
    %117 = vector.load %arg5[%c0_47, %c0_48] : memref<128x384xbf16, #tpu.memory_space<vmem>>, vector<128x384xbf16>
    %cst_49 = arith.constant dense<0.000000e+00> : vector<1x384xf32>
    %118 = tpu.matmul %116, %117, %cst_49 {dimension_numbers = #tpu.dot_dimension_numbers<[1], [0], [0], [1], [0, 0, 1, 1], [], []>} : vector<1x128xbf16>, vector<128x384xbf16>, vector<1x384xf32> -> vector<1x384xf32>
    %119 = vector.extract_strided_slice %115 {offsets = [0, 0], sizes = [1, 128], strides = [1, 1]} : vector<1x384xf32> to vector<1x128xf32>
    %120 = vector.extract_strided_slice %118 {offsets = [0, 0], sizes = [1, 128], strides = [1, 1]} : vector<1x384xf32> to vector<1x128xf32>
    %121 = arith.addf %119, %120 : vector<1x128xf32>
    %122 = arith.negf %121 : vector<1x128xf32>
    %123 = math.exp %122 : vector<1x128xf32>
    %cst_50 = arith.constant 1.000000e+00 : f32
    %124 = vector.broadcast %cst_50 : f32 to vector<1x128xf32>
    %125 = arith.addf %124, %123 : vector<1x128xf32>
    %126 = arith.divf %124, %125 : vector<1x128xf32>
    %127 = vector.extract_strided_slice %115 {offsets = [0, 128], sizes = [1, 128], strides = [1, 1]} : vector<1x384xf32> to vector<1x128xf32>
    %128 = vector.extract_strided_slice %118 {offsets = [0, 128], sizes = [1, 128], strides = [1, 1]} : vector<1x384xf32> to vector<1x128xf32>
    %129 = arith.addf %127, %128 : vector<1x128xf32>
    %130 = arith.negf %129 : vector<1x128xf32>
    %131 = math.exp %130 : vector<1x128xf32>
    %cst_51 = arith.constant 1.000000e+00 : f32
    %132 = vector.broadcast %cst_51 : f32 to vector<1x128xf32>
    %133 = arith.addf %132, %131 : vector<1x128xf32>
    %134 = arith.divf %132, %133 : vector<1x128xf32>
    %135 = vector.extract_strided_slice %115 {offsets = [0, 256], sizes = [1, 128], strides = [1, 1]} : vector<1x384xf32> to vector<1x128xf32>
    %136 = vector.extract_strided_slice %118 {offsets = [0, 256], sizes = [1, 128], strides = [1, 1]} : vector<1x384xf32> to vector<1x128xf32>
    %137 = arith.addf %136, %13 : vector<1x128xf32>
    %138 = arith.mulf %126, %137 : vector<1x128xf32>
    %139 = arith.addf %135, %138 : vector<1x128xf32>
    %140 = math.tanh %139 : vector<1x128xf32>
    %141 = arith.subf %110, %140 : vector<1x128xf32>
    %142 = arith.mulf %134, %141 : vector<1x128xf32>
    %143 = arith.addf %140, %142 : vector<1x128xf32>
    %c0_52 = arith.constant 0 : index
    %c3_53 = arith.constant 3 : index
    %c0_54 = arith.constant 0 : index
    %144 = vector.load %arg7[%c0_52, %c3_53, %c0_54] : memref<1x8x128xf32, #tpu.memory_space<vmem>>, vector<1x1x128xf32>
    %145 = vector.shape_cast %144 : vector<1x1x128xf32> to vector<1x128xf32>
    %146 = vector.shape_cast %143 : vector<1x128xf32> to vector<1x1x128xf32>
    tpu.vector_store %arg7[%c0_52, %c3_53, %c0_54], %146 {strides = array<i32>} : memref<1x8x128xf32, #tpu.memory_space<vmem>>, vector<1x1x128xf32>,
    %c0_55 = arith.constant 0 : index
    %c4 = arith.constant 4 : index
    %c0_56 = arith.constant 0 : index
    %147 = vector.load %arg9[%c0_55, %c4, %c0_56] : memref<1x8x384xf32, #tpu.memory_space<vmem>>, vector<1x1x384xf32>
    %148 = vector.shape_cast %147 : vector<1x1x384xf32> to vector<1x384xf32>
    %149 = arith.truncf %143 : vector<1x128xf32> to vector<1x128xbf16>
    %c0_57 = arith.constant 0 : index
    %c0_58 = arith.constant 0 : index
    %150 = vector.load %arg5[%c0_57, %c0_58] : memref<128x384xbf16, #tpu.memory_space<vmem>>, vector<128x384xbf16>
    %cst_59 = arith.constant dense<0.000000e+00> : vector<1x384xf32>
    %151 = tpu.matmul %149, %150, %cst_59 {dimension_numbers = #tpu.dot_dimension_numbers<[1], [0], [0], [1], [0, 0, 1, 1], [], []>} : vector<1x128xbf16>, vector<128x384xbf16>, vector<1x384xf32> -> vector<1x384xf32>
    %152 = vector.extract_strided_slice %148 {offsets = [0, 0], sizes = [1, 128], strides = [1, 1]} : vector<1x384xf32> to vector<1x128xf32>
    %153 = vector.extract_strided_slice %151 {offsets = [0, 0], sizes = [1, 128], strides = [1, 1]} : vector<1x384xf32> to vector<1x128xf32>
    %154 = arith.addf %152, %153 : vector<1x128xf32>
    %155 = arith.negf %154 : vector<1x128xf32>
    %156 = math.exp %155 : vector<1x128xf32>
    %cst_60 = arith.constant 1.000000e+00 : f32
    %157 = vector.broadcast %cst_60 : f32 to vector<1x128xf32>
    %158 = arith.addf %157, %156 : vector<1x128xf32>
    %159 = arith.divf %157, %158 : vector<1x128xf32>
    %160 = vector.extract_strided_slice %148 {offsets = [0, 128], sizes = [1, 128], strides = [1, 1]} : vector<1x384xf32> to vector<1x128xf32>
    %161 = vector.extract_strided_slice %151 {offsets = [0, 128], sizes = [1, 128], strides = [1, 1]} : vector<1x384xf32> to vector<1x128xf32>
    %162 = arith.addf %160, %161 : vector<1x128xf32>
    %163 = arith.negf %162 : vector<1x128xf32>
    %164 = math.exp %163 : vector<1x128xf32>
    %cst_61 = arith.constant 1.000000e+00 : f32
    %165 = vector.broadcast %cst_61 : f32 to vector<1x128xf32>
    %166 = arith.addf %165, %164 : vector<1x128xf32>
    %167 = arith.divf %165, %166 : vector<1x128xf32>
    %168 = vector.extract_strided_slice %148 {offsets = [0, 256], sizes = [1, 128], strides = [1, 1]} : vector<1x384xf32> to vector<1x128xf32>
    %169 = vector.extract_strided_slice %151 {offsets = [0, 256], sizes = [1, 128], strides = [1, 1]} : vector<1x384xf32> to vector<1x128xf32>
    %170 = arith.addf %169, %13 : vector<1x128xf32>
    %171 = arith.mulf %159, %170 : vector<1x128xf32>
    %172 = arith.addf %168, %171 : vector<1x128xf32>
    %173 = math.tanh %172 : vector<1x128xf32>
    %174 = arith.subf %143, %173 : vector<1x128xf32>
    %175 = arith.mulf %167, %174 : vector<1x128xf32>
    %176 = arith.addf %173, %175 : vector<1x128xf32>
    %c0_62 = arith.constant 0 : index
    %c4_63 = arith.constant 4 : index
    %c0_64 = arith.constant 0 : index
    %177 = vector.load %arg7[%c0_62, %c4_63, %c0_64] : memref<1x8x128xf32, #tpu.memory_space<vmem>>, vector<1x1x128xf32>
    %178 = vector.shape_cast %177 : vector<1x1x128xf32> to vector<1x128xf32>
    %179 = vector.shape_cast %176 : vector<1x128xf32> to vector<1x1x128xf32>
    tpu.vector_store %arg7[%c0_62, %c4_63, %c0_64], %179 {strides = array<i32>} : memref<1x8x128xf32, #tpu.memory_space<vmem>>, vector<1x1x128xf32>,
    %c0_65 = arith.constant 0 : index
    %c5 = arith.constant 5 : index
    %c0_66 = arith.constant 0 : index
    %180 = vector.load %arg9[%c0_65, %c5, %c0_66] : memref<1x8x384xf32, #tpu.memory_space<vmem>>, vector<1x1x384xf32>
    %181 = vector.shape_cast %180 : vector<1x1x384xf32> to vector<1x384xf32>
    %182 = arith.truncf %176 : vector<1x128xf32> to vector<1x128xbf16>
    %c0_67 = arith.constant 0 : index
    %c0_68 = arith.constant 0 : index
    %183 = vector.load %arg5[%c0_67, %c0_68] : memref<128x384xbf16, #tpu.memory_space<vmem>>, vector<128x384xbf16>
    %cst_69 = arith.constant dense<0.000000e+00> : vector<1x384xf32>
    %184 = tpu.matmul %182, %183, %cst_69 {dimension_numbers = #tpu.dot_dimension_numbers<[1], [0], [0], [1], [0, 0, 1, 1], [], []>} : vector<1x128xbf16>, vector<128x384xbf16>, vector<1x384xf32> -> vector<1x384xf32>
    %185 = vector.extract_strided_slice %181 {offsets = [0, 0], sizes = [1, 128], strides = [1, 1]} : vector<1x384xf32> to vector<1x128xf32>
    %186 = vector.extract_strided_slice %184 {offsets = [0, 0], sizes = [1, 128], strides = [1, 1]} : vector<1x384xf32> to vector<1x128xf32>
    %187 = arith.addf %185, %186 : vector<1x128xf32>
    %188 = arith.negf %187 : vector<1x128xf32>
    %189 = math.exp %188 : vector<1x128xf32>
    %cst_70 = arith.constant 1.000000e+00 : f32
    %190 = vector.broadcast %cst_70 : f32 to vector<1x128xf32>
    %191 = arith.addf %190, %189 : vector<1x128xf32>
    %192 = arith.divf %190, %191 : vector<1x128xf32>
    %193 = vector.extract_strided_slice %181 {offsets = [0, 128], sizes = [1, 128], strides = [1, 1]} : vector<1x384xf32> to vector<1x128xf32>
    %194 = vector.extract_strided_slice %184 {offsets = [0, 128], sizes = [1, 128], strides = [1, 1]} : vector<1x384xf32> to vector<1x128xf32>
    %195 = arith.addf %193, %194 : vector<1x128xf32>
    %196 = arith.negf %195 : vector<1x128xf32>
    %197 = math.exp %196 : vector<1x128xf32>
    %cst_71 = arith.constant 1.000000e+00 : f32
    %198 = vector.broadcast %cst_71 : f32 to vector<1x128xf32>
    %199 = arith.addf %198, %197 : vector<1x128xf32>
    %200 = arith.divf %198, %199 : vector<1x128xf32>
    %201 = vector.extract_strided_slice %181 {offsets = [0, 256], sizes = [1, 128], strides = [1, 1]} : vector<1x384xf32> to vector<1x128xf32>
    %202 = vector.extract_strided_slice %184 {offsets = [0, 256], sizes = [1, 128], strides = [1, 1]} : vector<1x384xf32> to vector<1x128xf32>
    %203 = arith.addf %202, %13 : vector<1x128xf32>
    %204 = arith.mulf %192, %203 : vector<1x128xf32>
    %205 = arith.addf %201, %204 : vector<1x128xf32>
    %206 = math.tanh %205 : vector<1x128xf32>
    %207 = arith.subf %176, %206 : vector<1x128xf32>
    %208 = arith.mulf %200, %207 : vector<1x128xf32>
    %209 = arith.addf %206, %208 : vector<1x128xf32>
    %c0_72 = arith.constant 0 : index
    %c5_73 = arith.constant 5 : index
    %c0_74 = arith.constant 0 : index
    %210 = vector.load %arg7[%c0_72, %c5_73, %c0_74] : memref<1x8x128xf32, #tpu.memory_space<vmem>>, vector<1x1x128xf32>
    %211 = vector.shape_cast %210 : vector<1x1x128xf32> to vector<1x128xf32>
    %212 = vector.shape_cast %209 : vector<1x128xf32> to vector<1x1x128xf32>
    tpu.vector_store %arg7[%c0_72, %c5_73, %c0_74], %212 {strides = array<i32>} : memref<1x8x128xf32, #tpu.memory_space<vmem>>, vector<1x1x128xf32>,
    %c0_75 = arith.constant 0 : index
    %c6 = arith.constant 6 : index
    %c0_76 = arith.constant 0 : index
    %213 = vector.load %arg9[%c0_75, %c6, %c0_76] : memref<1x8x384xf32, #tpu.memory_space<vmem>>, vector<1x1x384xf32>
    %214 = vector.shape_cast %213 : vector<1x1x384xf32> to vector<1x384xf32>
    %215 = arith.truncf %209 : vector<1x128xf32> to vector<1x128xbf16>
    %c0_77 = arith.constant 0 : index
    %c0_78 = arith.constant 0 : index
    %216 = vector.load %arg5[%c0_77, %c0_78] : memref<128x384xbf16, #tpu.memory_space<vmem>>, vector<128x384xbf16>
    %cst_79 = arith.constant dense<0.000000e+00> : vector<1x384xf32>
    %217 = tpu.matmul %215, %216, %cst_79 {dimension_numbers = #tpu.dot_dimension_numbers<[1], [0], [0], [1], [0, 0, 1, 1], [], []>} : vector<1x128xbf16>, vector<128x384xbf16>, vector<1x384xf32> -> vector<1x384xf32>
    %218 = vector.extract_strided_slice %214 {offsets = [0, 0], sizes = [1, 128], strides = [1, 1]} : vector<1x384xf32> to vector<1x128xf32>
    %219 = vector.extract_strided_slice %217 {offsets = [0, 0], sizes = [1, 128], strides = [1, 1]} : vector<1x384xf32> to vector<1x128xf32>
    %220 = arith.addf %218, %219 : vector<1x128xf32>
    %221 = arith.negf %220 : vector<1x128xf32>
    %222 = math.exp %221 : vector<1x128xf32>
    %cst_80 = arith.constant 1.000000e+00 : f32
    %223 = vector.broadcast %cst_80 : f32 to vector<1x128xf32>
    %224 = arith.addf %223, %222 : vector<1x128xf32>
    %225 = arith.divf %223, %224 : vector<1x128xf32>
    %226 = vector.extract_strided_slice %214 {offsets = [0, 128], sizes = [1, 128], strides = [1, 1]} : vector<1x384xf32> to vector<1x128xf32>
    %227 = vector.extract_strided_slice %217 {offsets = [0, 128], sizes = [1, 128], strides = [1, 1]} : vector<1x384xf32> to vector<1x128xf32>
    %228 = arith.addf %226, %227 : vector<1x128xf32>
    %229 = arith.negf %228 : vector<1x128xf32>
    %230 = math.exp %229 : vector<1x128xf32>
    %cst_81 = arith.constant 1.000000e+00 : f32
    %231 = vector.broadcast %cst_81 : f32 to vector<1x128xf32>
    %232 = arith.addf %231, %230 : vector<1x128xf32>
    %233 = arith.divf %231, %232 : vector<1x128xf32>
    %234 = vector.extract_strided_slice %214 {offsets = [0, 256], sizes = [1, 128], strides = [1, 1]} : vector<1x384xf32> to vector<1x128xf32>
    %235 = vector.extract_strided_slice %217 {offsets = [0, 256], sizes = [1, 128], strides = [1, 1]} : vector<1x384xf32> to vector<1x128xf32>
    %236 = arith.addf %235, %13 : vector<1x128xf32>
    %237 = arith.mulf %225, %236 : vector<1x128xf32>
    %238 = arith.addf %234, %237 : vector<1x128xf32>
    %239 = math.tanh %238 : vector<1x128xf32>
    %240 = arith.subf %209, %239 : vector<1x128xf32>
    %241 = arith.mulf %233, %240 : vector<1x128xf32>
    %242 = arith.addf %239, %241 : vector<1x128xf32>
    %c0_82 = arith.constant 0 : index
    %c6_83 = arith.constant 6 : index
    %c0_84 = arith.constant 0 : index
    %243 = vector.load %arg7[%c0_82, %c6_83, %c0_84] : memref<1x8x128xf32, #tpu.memory_space<vmem>>, vector<1x1x128xf32>
    %244 = vector.shape_cast %243 : vector<1x1x128xf32> to vector<1x128xf32>
    %245 = vector.shape_cast %242 : vector<1x128xf32> to vector<1x1x128xf32>
    tpu.vector_store %arg7[%c0_82, %c6_83, %c0_84], %245 {strides = array<i32>} : memref<1x8x128xf32, #tpu.memory_space<vmem>>, vector<1x1x128xf32>,
    %c0_85 = arith.constant 0 : index
    %c7 = arith.constant 7 : index
    %c0_86 = arith.constant 0 : index
    %246 = vector.load %arg9[%c0_85, %c7, %c0_86] : memref<1x8x384xf32, #tpu.memory_space<vmem>>, vector<1x1x384xf32>
    %247 = vector.shape_cast %246 : vector<1x1x384xf32> to vector<1x384xf32>
    %248 = arith.truncf %242 : vector<1x128xf32> to vector<1x128xbf16>
    %c0_87 = arith.constant 0 : index
    %c0_88 = arith.constant 0 : index
    %249 = vector.load %arg5[%c0_87, %c0_88] : memref<128x384xbf16, #tpu.memory_space<vmem>>, vector<128x384xbf16>
    %cst_89 = arith.constant dense<0.000000e+00> : vector<1x384xf32>
    %250 = tpu.matmul %248, %249, %cst_89 {dimension_numbers = #tpu.dot_dimension_numbers<[1], [0], [0], [1], [0, 0, 1, 1], [], []>} : vector<1x128xbf16>, vector<128x384xbf16>, vector<1x384xf32> -> vector<1x384xf32>
    %251 = vector.extract_strided_slice %247 {offsets = [0, 0], sizes = [1, 128], strides = [1, 1]} : vector<1x384xf32> to vector<1x128xf32>
    %252 = vector.extract_strided_slice %250 {offsets = [0, 0], sizes = [1, 128], strides = [1, 1]} : vector<1x384xf32> to vector<1x128xf32>
    %253 = arith.addf %251, %252 : vector<1x128xf32>
    %254 = arith.negf %253 : vector<1x128xf32>
    %255 = math.exp %254 : vector<1x128xf32>
    %cst_90 = arith.constant 1.000000e+00 : f32
    %256 = vector.broadcast %cst_90 : f32 to vector<1x128xf32>
    %257 = arith.addf %256, %255 : vector<1x128xf32>
    %258 = arith.divf %256, %257 : vector<1x128xf32>
    %259 = vector.extract_strided_slice %247 {offsets = [0, 128], sizes = [1, 128], strides = [1, 1]} : vector<1x384xf32> to vector<1x128xf32>
    %260 = vector.extract_strided_slice %250 {offsets = [0, 128], sizes = [1, 128], strides = [1, 1]} : vector<1x384xf32> to vector<1x128xf32>
    %261 = arith.addf %259, %260 : vector<1x128xf32>
    %262 = arith.negf %261 : vector<1x128xf32>
    %263 = math.exp %262 : vector<1x128xf32>
    %cst_91 = arith.constant 1.000000e+00 : f32
    %264 = vector.broadcast %cst_91 : f32 to vector<1x128xf32>
    %265 = arith.addf %264, %263 : vector<1x128xf32>
    %266 = arith.divf %264, %265 : vector<1x128xf32>
    %267 = vector.extract_strided_slice %247 {offsets = [0, 256], sizes = [1, 128], strides = [1, 1]} : vector<1x384xf32> to vector<1x128xf32>
    %268 = vector.extract_strided_slice %250 {offsets = [0, 256], sizes = [1, 128], strides = [1, 1]} : vector<1x384xf32> to vector<1x128xf32>
    %269 = arith.addf %268, %13 : vector<1x128xf32>
    %270 = arith.mulf %258, %269 : vector<1x128xf32>
    %271 = arith.addf %267, %270 : vector<1x128xf32>
    %272 = math.tanh %271 : vector<1x128xf32>
    %273 = arith.subf %242, %272 : vector<1x128xf32>
    %274 = arith.mulf %266, %273 : vector<1x128xf32>
    %275 = arith.addf %272, %274 : vector<1x128xf32>
    %c0_92 = arith.constant 0 : index
    %c7_93 = arith.constant 7 : index
    %c0_94 = arith.constant 0 : index
    %276 = vector.load %arg7[%c0_92, %c7_93, %c0_94] : memref<1x8x128xf32, #tpu.memory_space<vmem>>, vector<1x1x128xf32>
    %277 = vector.shape_cast %276 : vector<1x1x128xf32> to vector<1x128xf32>
    %278 = vector.shape_cast %275 : vector<1x128xf32> to vector<1x1x128xf32>
    tpu.vector_store %arg7[%c0_92, %c7_93, %c0_94], %278 {strides = array<i32>} : memref<1x8x128xf32, #tpu.memory_space<vmem>>, vector<1x1x128xf32>,
    %c0_95 = arith.constant 0 : index
    %c0_96 = arith.constant 0 : index
    %279 = vector.load %arg8[%c0_95, %c0_96] : memref<1x128xf32, #tpu.memory_space<vmem>>, vector<1x128xf32>
    tpu.vector_store %arg8[%c0_95, %c0_96], %275 {strides = array<i32>} : memref<1x128xf32, #tpu.memory_space<vmem>>, vector<1x128xf32>,
    return
  }
  func.func @transform_0(%arg0: i32, %arg1: i32) -> (i32, i32, i32) {
    %c0_i32 = arith.constant 0 : i32
    %c0_i32_0 = arith.constant 0 : i32
    return %arg0, %arg1, %c0_i32 : i32, i32, i32
  }
  func.func @transform_1(%arg0: i32, %arg1: i32) -> (i32, i32) {
    %c0_i32 = arith.constant 0 : i32
    %c0_i32_0 = arith.constant 0 : i32
    %c0_i32_1 = arith.constant 0 : i32
    return %c0_i32, %c0_i32_0 : i32, i32
  }
  func.func @transform_2(%arg0: i32, %arg1: i32) -> (i32, i32) {
    %c0_i32 = arith.constant 0 : i32
    %c0_i32_0 = arith.constant 0 : i32
    %c0_i32_1 = arith.constant 0 : i32
    return %c0_i32, %c0_i32_0 : i32, i32
  }
  func.func @transform_3(%arg0: i32, %arg1: i32) -> (i32, i32) {
    %c0_i32 = arith.constant 0 : i32
    %c0_i32_0 = arith.constant 0 : i32
    %c0_i32_1 = arith.constant 0 : i32
    return %c0_i32, %c0_i32_0 : i32, i32
  }
  func.func @transform_4(%arg0: i32, %arg1: i32) -> (i32, i32) {
    %c0_i32 = arith.constant 0 : i32
    %c0_i32_0 = arith.constant 0 : i32
    %c0_i32_1 = arith.constant 0 : i32
    return %c0_i32, %c0_i32_0 : i32, i32
  }
  func.func @transform_5(%arg0: i32, %arg1: i32) -> (i32, i32, i32) {
    %c0_i32 = arith.constant 0 : i32
    %c0_i32_0 = arith.constant 0 : i32
    return %arg0, %arg1, %c0_i32 : i32, i32, i32
  }
}

</mosaic_0001>

<llo_original>
// kernel: tpu_custom_call.1
$region0: #{tpu_custom_call.1}
  #allocation0 [shape = 'u32[]', space=smem, size = 0x4, offset = 0x4, fixed_abs, tag = 'smem constant byte address 0x4 - core index']
  #allocation1 [shape = 'u32[144,128]{1,0:T(1,128)}', space=vmem, size = 0x12000, scoped, tag = 'internal scratch']
  #allocation2 [shape = 'f32[1,128]{1,0:T(1,128)}', space=vmem, size = 0x200, scoped, tag = 'scratch operand']
  #allocation3 [shape = 'f32[1,8,384]{2,1,0:T(8,128)}', space=vmem, size = 0x3000, scoped, tag = 'scratch operand']
  %s0 = inlined_call_operand.hbm [shape: bf16[2,8,16], index: 0, kind: input, shape index: {}]
  %s1 = inlined_call_operand.hbm [shape: bf16[16,384], index: 1, kind: input, shape index: {}]
  %s2 = inlined_call_operand.vmem [shape: f32[1,384], index: 2, kind: input, shape index: {}]
  %s3 = inlined_call_operand.hbm [shape: bf16[128,384], index: 3, kind: input, shape index: {}]
  %s4 = inlined_call_operand.vmem [shape: f32[1,128], index: 4, kind: input, shape index: {}]
  %s5 = inlined_call_operand.hbm [shape: f32[2,8,128], index: 5, kind: output, shape index: {}]
  %s6 = sld [smem:[#allocation0]]
  $region69: #{tpu_custom_call.1} parent=0
    _
  %s8 = ssub.s32 1, %s6
  %s9 = scalar_select 0, %s8, %s6
  $region1: #{tpu_custom_call.1} parent=0
    #allocation4 [shape = 'u8[4096]{0}', space=vmem, size = 0x1000, scoped, tag = 'input window, operand 0']
    #allocation5 [shape = 's32[2]{0}', space=sflag, size = 0x8, scoped, tag = 'scoped memory for tpu_custom_call.1']
    #allocation6 [shape = 's32[2]{0}', space=sflag, size = 0x8, scoped, tag = 'scoped memory for tpu_custom_call.1']
    #allocation7 [shape = 'u8[12288]{0}', space=vmem, size = 0x3000, scoped, tag = 'input window, operand 1, single buffered']
    #allocation8 [shape = 's32[1]{0}', space=sflag, size = 0x4, scoped, tag = 'scoped memory for tpu_custom_call.1']
    #allocation9 [shape = 'u8[98304]{0}', space=vmem, size = 0x18000, scoped, tag = 'input window, operand 3, single buffered']
    #allocation10 [shape = 'u8[8192]{0}', space=vmem, size = 0x2000, scoped, tag = 'output window, operand 0']
    %10 = vsyncpa [#allocation5], 0
    %s11 = scalar_lea.sflag [#allocation5], 1
    %12 = vsyncpa %s11, 0
    %13 = vsyncpa [#allocation8], 0
    %14 = vsyncpa [#allocation6], 0
    %s15 = scalar_lea.sflag [#allocation6], 1
    %16 = vsyncpa %s15, 0
    loop: start=0, step=1, limit=4
    $region2: #{tpu_custom_call.1} parent=1 // loop_pre_header
      _
    $region3: #{tpu_custom_call.1} parent=1 // loop_header
      %s18 = sphi 0, %s22
      %p19 = scmp.ge.s32.totalorder %s18, 4
      %s25 = sphi 0, %s37
      %s26 = sphi 0, %s33
      %s27 = sphi 0, %s25
      %s28 = sphi 0, %s26
      %s29 = sphi 0, %s27
      %s30 = sphi 0, %s28
      %s42 = sphi 0, %s44
      %s45 = sphi 0, %s42
      %s46 = sphi 0, %s45
      %s62 = sphi 0, %s46
      %s66 = sphi 0, %s66
      %s68 = sphi 0, %s66
      %s69 = sphi 0, %s68
      %s83 = sphi 0, %s69
      %s87 = sphi 0, %s87
      %s89 = sphi 0, %s87
      %s90 = sphi 0, %s89
      %s104 = sphi 0, %s90
      %s108 = sphi 0, %s108
      %s110 = sphi 0, %s108
      %s111 = sphi 0, %s110
      %s125 = sphi 0, %s111
      %s129 = sphi 0, %s129
      %s131 = sphi 0, %s129
      %s132 = sphi 0, %s131
      %s146 = sphi 0, %s132
      %s154 = sphi 0, %s156
      %s157 = sphi 0, %s154
      %s158 = sphi 0, %s157
      %s174 = sphi 0, %s158
    $region4: #{tpu_custom_call.1} parent=1 // loop_header_branch
      %21 = sbr.rel (%p19) target = $region8
    $region5: #{tpu_custom_call.1} parent=1 // loop_body
      %s23 = ssub.s32 %s18, 1
      %s24 = ssub.s32 %s18, 2
      %s31 = sadd.s32 1, %s26
      %p32 = scmp.ge.s32.totalorder %s31, 1
      %s33 = scalar_select %p32, 0, %s31
      %s34 = sadd.s32 1, %s25
      %s35 = scalar_select %p32, %s34, %s25
      %p36 = scmp.ge.s32.totalorder %s35, 2
      %s37 = scalar_select %p36, 0, %s35
      %s38 = ssub.s32 %s25, %s37
      %s39 = ssub.s32 %s26, %s33
      %s40 = sor.u32 %s38, %s39
      %p41 = scmp.eq.s32.totalorder %s40, 0
      %s43 = sadd.s32 %s42, 1
      %s44 = scalar_select %p41, %s42, %s43
      %p47 = pneg %p41
      %p48 = scmp.eq.s32.totalorder %s18, 1
      %p49 = por %p47, %p48
      %p50 = scmp.ne.s32.totalorder %s42, %s45
      %p51 = scmp.eq.s32.totalorder %s18, 0
      %p52 = por %p50, %p51
      %p53 = scmp.ne.s32.totalorder %s42, %s45
      %p54 = scmp.eq.s32.totalorder %s23, 1
      %p55 = por %p53, %p54
      %p56 = scmp.ne.s32.totalorder %s45, %s46
      %p57 = scmp.eq.s32.totalorder %s23, 0
      %p58 = por %p56, %p57
      %p59 = scmp.ne.s32.totalorder %s45, %s46
      %p60 = scmp.eq.s32.totalorder %s24, 1
      %p61 = por %p59, %p60
      %p63 = scmp.ne.s32.totalorder %s46, %s62
      %p64 = scmp.eq.s32.totalorder %s24, 0
      %p65 = por %p63, %p64
      %s67 = sadd.s32 %s66, 1
      %p70 = scmp.eq.s32.totalorder %s18, 1
      %p71 = scmp.ne.s32.totalorder %s66, %s68
      %p72 = scmp.eq.s32.totalorder %s18, 0
      %p73 = por %p71, %p72
      %p74 = scmp.ne.s32.totalorder %s66, %s68
      %p75 = scmp.eq.s32.totalorder %s23, 1
      %p76 = por %p74, %p75
      %p77 = scmp.ne.s32.totalorder %s68, %s69
      %p78 = scmp.eq.s32.totalorder %s23, 0
      %p79 = por %p77, %p78
      %p80 = scmp.ne.s32.totalorder %s68, %s69
      %p81 = scmp.eq.s32.totalorder %s24, 1
      %p82 = por %p80, %p81
      %p84 = scmp.ne.s32.totalorder %s69, %s83
      %p85 = scmp.eq.s32.totalorder %s24, 0
      %p86 = por %p84, %p85
      %s88 = sadd.s32 %s87, 1
      %p91 = scmp.eq.s32.totalorder %s18, 1
      %p92 = scmp.ne.s32.totalorder %s87, %s89
      %p93 = scmp.eq.s32.totalorder %s18, 0
      %p94 = por %p92, %p93
      %p95 = scmp.ne.s32.totalorder %s87, %s89
      %p96 = scmp.eq.s32.totalorder %s23, 1
      %p97 = por %p95, %p96
      %p98 = scmp.ne.s32.totalorder %s89, %s90
      %p99 = scmp.eq.s32.totalorder %s23, 0
      %p100 = por %p98, %p99
      %p101 = scmp.ne.s32.totalorder %s89, %s90
      %p102 = scmp.eq.s32.totalorder %s24, 1
      %p103 = por %p101, %p102
      %p105 = scmp.ne.s32.totalorder %s90, %s104
      %p106 = scmp.eq.s32.totalorder %s24, 0
      %p107 = por %p105, %p106
      %s109 = sadd.s32 %s108, 1
      %p112 = scmp.eq.s32.totalorder %s18, 1
      %p113 = scmp.ne.s32.totalorder %s108, %s110
      %p114 = scmp.eq.s32.totalorder %s18, 0
      %p115 = por %p113, %p114
      %p116 = scmp.ne.s32.totalorder %s108, %s110
      %p117 = scmp.eq.s32.totalorder %s23, 1
      %p118 = por %p116, %p117
      %p119 = scmp.ne.s32.totalorder %s110, %s111
      %p120 = scmp.eq.s32.totalorder %s23, 0
      %p121 = por %p119, %p120
      %p122 = scmp.ne.s32.totalorder %s110, %s111
      %p123 = scmp.eq.s32.totalorder %s24, 1
      %p124 = por %p122, %p123
      %p126 = scmp.ne.s32.totalorder %s111, %s125
      %p127 = scmp.eq.s32.totalorder %s24, 0
      %p128 = por %p126, %p127
      %s130 = sadd.s32 %s129, 1
      %p133 = scmp.eq.s32.totalorder %s18, 1
      %p134 = scmp.ne.s32.totalorder %s129, %s131
      %p135 = scmp.eq.s32.totalorder %s18, 0
      %p136 = por %p134, %p135
      %p137 = scmp.ne.s32.totalorder %s129, %s131
      %p138 = scmp.eq.s32.totalorder %s23, 1
      %p139 = por %p137, %p138
      %p140 = scmp.ne.s32.totalorder %s131, %s132
      %p141 = scmp.eq.s32.totalorder %s23, 0
      %p142 = por %p140, %p141
      %p143 = scmp.ne.s32.totalorder %s131, %s132
      %p144 = scmp.eq.s32.totalorder %s24, 1
      %p145 = por %p143, %p144
      %p147 = scmp.ne.s32.totalorder %s132, %s146
      %p148 = scmp.eq.s32.totalorder %s24, 0
      %p149 = por %p147, %p148
      %s150 = ssub.s32 %s25, %s37
      %s151 = ssub.s32 %s26, %s33
      %s152 = sor.u32 %s150, %s151
      %p153 = scmp.eq.s32.totalorder %s152, 0
      %s155 = sadd.s32 %s154, 1
      %s156 = scalar_select %p153, %s154, %s155
      %p159 = pneg %p153
      %p160 = scmp.eq.s32.totalorder %s18, 1
      %p161 = por %p159, %p160
      %p162 = scmp.ne.s32.totalorder %s154, %s157
      %p163 = scmp.eq.s32.totalorder %s18, 0
      %p164 = por %p162, %p163
      %p165 = scmp.ne.s32.totalorder %s154, %s157
      %p166 = scmp.eq.s32.totalorder %s23, 1
      %p167 = por %p165, %p166
      %p168 = scmp.ne.s32.totalorder %s157, %s158
      %p169 = scmp.eq.s32.totalorder %s23, 0
      %p170 = por %p168, %p169
      %p171 = scmp.ne.s32.totalorder %s157, %s158
      %p172 = scmp.eq.s32.totalorder %s24, 1
      %p173 = por %p171, %p172
      %p175 = scmp.ne.s32.totalorder %s158, %s174
      %p176 = scmp.eq.s32.totalorder %s24, 0
      %p177 = por %p175, %p176
      %p178 = scmp.le.s32.totalorder 1, %s18
      %p179 = scmp.lt.s32.totalorder %s18, 3
      %p180 = pnand %p178, %p179
      %p181 = pneg %p180
      // Predicated region
      $region9: #{tpu_custom_call.1} parent=5 // pred_check
        _
      $region10: #{tpu_custom_call.1} parent=5 // pred_check_branch
        %183 = sbr.rel (%p180) target = $region12
      $region11: #{tpu_custom_call.1} parent=5 // pred_region
        %s184 = ssub.s32 %s18, 1
        // Predicated region
        $region13: #{tpu_custom_call.1} parent=11 // pred_check
          %p185 = pneg %p79
        $region14: #{tpu_custom_call.1} parent=11 // pred_check_branch
          %187 = sbr.rel (%p185) target = $region16
        $region15: #{tpu_custom_call.1} parent=11 // pred_region
          %s189 = ssub.s32 384, 384
          %190 = vsyncadd [#allocation8], %s189
          %s191 = sshll.u32 [#allocation7], 4
          %s192 = int_to_ptr.vmem [resolvable:$true] %s191
          %197 = dma.hbm_to_vmem [thread:$0]  %s1, 384, %s192, [#allocation8], 192, 192, 12
        $region16: #{tpu_custom_call.1} parent=11 // pred_fallthru
          _
        // Predicated region
        $region17: #{tpu_custom_call.1} parent=11 // pred_check
          %p198 = pneg %p100
        $region18: #{tpu_custom_call.1} parent=11 // pred_check_branch
          %200 = sbr.rel (%p198) target = $region20
        $region19: #{tpu_custom_call.1} parent=11 // pred_region
          _
        $region20: #{tpu_custom_call.1} parent=11 // pred_fallthru
          _
        // Predicated region
        $region21: #{tpu_custom_call.1} parent=11 // pred_check
          %p201 = pneg %p121
        $region22: #{tpu_custom_call.1} parent=11 // pred_check_branch
          %203 = sbr.rel (%p201) target = $region24
        $region23: #{tpu_custom_call.1} parent=11 // pred_region
          %s205 = ssub.s32 3072, 3072
          %206 = vsyncadd [#allocation8], %s205
          %s207 = sshll.u32 [#allocation9], 4
          %s208 = int_to_ptr.vmem [resolvable:$true] %s207
          %213 = dma.hbm_to_vmem [thread:$0]  %s3, 3072, %s208, [#allocation8], 192, 192, 12
        $region24: #{tpu_custom_call.1} parent=11 // pred_fallthru
          _
        // Predicated region
        $region25: #{tpu_custom_call.1} parent=11 // pred_check
          %p214 = pneg %p142
        $region26: #{tpu_custom_call.1} parent=11 // pred_check_branch
          %216 = sbr.rel (%p214) target = $region28
        $region27: #{tpu_custom_call.1} parent=11 // pred_region
          _
        $region28: #{tpu_custom_call.1} parent=11 // pred_fallthru
          _
      $region12: #{tpu_custom_call.1} parent=5 // pred_fallthru
        _
      %p217 = scmp.lt.s32.totalorder %s18, 2
      // Predicated region
      $region29: #{tpu_custom_call.1} parent=5 // pred_check
        %p218 = pneg %p217
      $region30: #{tpu_custom_call.1} parent=5 // pred_check_branch
        %220 = sbr.rel (%p218) target = $region32
      $region31: #{tpu_custom_call.1} parent=5 // pred_region
        // Predicated region
        $region33: #{tpu_custom_call.1} parent=31 // pred_check
          %p221 = pneg %p52
        $region34: #{tpu_custom_call.1} parent=31 // pred_check_branch
          %223 = sbr.rel (%p221) target = $region36
        $region35: #{tpu_custom_call.1} parent=31 // pred_region
          %s224 = sand.u32 %s42, 1
          %s225 = scalar_lea.sflag [#allocation5], %s224
          %s226 = sand.u32 %s42, 1
          %s227 = smul.addr %s226, 4
          %s228 = scalar_lea.vmem [#allocation4], %s227
          %s230 = ssub.s32 64, 64
          %231 = vsyncadd %s225, %s230
          %s232 = sadd.s32 %s26, %s25
          %s233 = smul.addr %s232, 64
          %s234 = scalar_lea.hbm %s0, %s233
          %s236 = sshll.u32 %s228, 4
          %s237 = int_to_ptr.vmem [resolvable:$true] %s236
          %239 = dma.hbm_to_vmem [thread:$0]  %s234, 64, %s237, %s225
        $region36: #{tpu_custom_call.1} parent=31 // pred_fallthru
          _
      $region32: #{tpu_custom_call.1} parent=5 // pred_fallthru
        _
      %p240 = scmp.le.s32.totalorder 1, %s18
      %p241 = scmp.lt.s32.totalorder %s18, 3
      %p242 = pnand %p240, %p241
      %p243 = pneg %p242
      // Predicated region
      $region37: #{tpu_custom_call.1} parent=5 // pred_check
        _
      $region38: #{tpu_custom_call.1} parent=5 // pred_check_branch
        %245 = sbr.rel (%p242) target = $region40
      $region39: #{tpu_custom_call.1} parent=5 // pred_region
        %s246 = ssub.s32 %s18, 1
        %s247 = sand.u32 %s45, 1
        %s248 = scalar_lea.sflag [#allocation5], %s247
        %s249 = sand.u32 %s45, 1
        %s250 = smul.addr %s249, 4
        %s251 = scalar_lea.vmem [#allocation4], %s250
        // Predicated region
        $region41: #{tpu_custom_call.1} parent=39 // pred_check
          %p252 = pneg %p58
        $region42: #{tpu_custom_call.1} parent=39 // pred_check_branch
          %254 = sbr.rel (%p252) target = $region44
        $region43: #{tpu_custom_call.1} parent=39 // pred_region
          %255 = dma.done %s248, 64
        $region44: #{tpu_custom_call.1} parent=39 // pred_fallthru
          _
        // Predicated region
        $region45: #{tpu_custom_call.1} parent=39 // pred_check
          %p256 = pneg %p79
        $region46: #{tpu_custom_call.1} parent=39 // pred_check_branch
          %258 = sbr.rel (%p256) target = $region48
        $region47: #{tpu_custom_call.1} parent=39 // pred_region
          %259 = dma.done [#allocation8], 384
        $region48: #{tpu_custom_call.1} parent=39 // pred_fallthru
          _
        // Predicated region
        $region49: #{tpu_custom_call.1} parent=39 // pred_check
          %p260 = pneg %p121
        $region50: #{tpu_custom_call.1} parent=39 // pred_check_branch
          %262 = sbr.rel (%p260) target = $region52
        $region51: #{tpu_custom_call.1} parent=39 // pred_region
          %263 = dma.done [#allocation8], 3072
        $region52: #{tpu_custom_call.1} parent=39 // pred_fallthru
          _
        %s264 = sand.u32 %s45, 1
        %s265 = scalar_lea.sflag [#allocation5], %s264
        %s266 = sand.u32 %s45, 1
        %s267 = smul.addr %s266, 4
        %s268 = scalar_lea.vmem [#allocation4], %s267
        %p269 = pneg %p58
        %p270 = pneg %p55
        %p271 = pneg %p79
        %p272 = pneg %p76
        %p273 = pneg %p100
        %p274 = pneg %p97
        %p275 = pneg %p121
        %p276 = pneg %p118
        %p277 = pneg %p142
        %p278 = pneg %p139
        %p279 = pneg %p170
        %p280 = pneg %p167
        %s281 = sand.u32 %s157, 1
        %s282 = scalar_lea.sflag [#allocation6], %s281
        %s283 = sand.u32 %s157, 1
        %s284 = smul.addr %s283, 8
        %s285 = scalar_lea.vmem [#allocation10], %s284
        %p287 = scmp.eq.s32.totalorder %s28, 0
        // Predicated region
        $region53: #{tpu_custom_call.1} parent=39 // pred_check
          %p288 = pneg %p287
        $region54: #{tpu_custom_call.1} parent=39 // pred_check_branch
          %290 = sbr.rel (%p288) target = $region56
        $region55: #{tpu_custom_call.1} parent=39 // pred_region
          %291 = vst [vmem:[#allocation2] sm:$0x1] 0.0
        $region56: #{tpu_custom_call.1} parent=39 // pred_fallthru
          _
        %v292 = vld [vmem:[%s251] sm:$0xf]
        %v293 = vld [vmem:[#allocation7] sm:$0xff]
        %v294 = vld [vmem:[#allocation7 + $0x8] sm:$0xf]
        %v295 = vld [vmem:[#allocation7 + $0xc] sm:$0xff]
        %v296 = vld [vmem:[#allocation7 + $0x14] sm:$0xf]
        %v297 = vld [vmem:[%s2] sm:$0x7]
        %v299 = vlaneseq
        %v300 = vshrl.u32 %v299, 7
        %v301 = vsub.s32 0, %v300
        %v302 = vrot.slane %v297, %v301
        %v303 = vlaneseq
        %v304 = vshrl.u32 %v303, 7
        %v305 = vsub.s32 1, %v304
        %v306 = vrot.slane %v297, %v305
        %v307 = vlaneseq
        %v308 = vshrl.u32 %v307, 7
        %v309 = vsub.s32 2, %v308
        %v310 = vrot.slane %v297, %v309
        %v318 = vunpack.c.l.b16 %v293
        %v319 = vunpack.c.h.b16 %v293
        %v320 = vunpack.c.l.b16 %v294
        %v321 = vunpack.c.l.b16 %v295
        %v322 = vunpack.c.h.b16 %v295
        %v323 = vunpack.c.l.b16 %v296
        %v324 = vpack.c.b16 %v321, %v318
        %v325 = vpack.c.b16 %v322, %v319
        %v326 = vpack.c.b16 %v323, %v320
        %vm330 = vcmask 130048
        %v332 = vsel %vm330, %v292, 0
        %334 = vmatprep.subr.bf16.mxu0 %v325
        %335 = vmatpush1.bf16.msra.mxu0 %v324
        %336 = vmatprep.subr.bf16.mxu0 0
        %337 = vmatpush1.bf16.msra.mxu0 0
        %338 = vmatprep.subr.bf16.mxu0 0
        %339 = vmatpush1.bf16.msra.mxu0 0
        %340 = vmatprep.subr.bf16.mxu0 0
        %341 = vmatpush1.bf16.msra.mxu0 0
        %342 = vmatprep.subr.bf16.mxu0 0
        %343 = vmatpush1.bf16.msra.mxu0 0
        %344 = vmatprep.subr.bf16.mxu0 0
        %345 = vmatpush1.bf16.msra.mxu0 0
        %346 = vmatprep.subr.bf16.mxu0 0
        %347 = vmatpush1.bf16.msra.mxu0 0
        %348 = vmatprep.subr.bf16.mxu0 0
        %349 = vmatpush1.bf16.msra.mxu0 0
        %350 = vmatprep.subr.bf16.mxu0 0
        %351 = vmatpush1.bf16.msra.mxu0 0
        %352 = vmatprep.subr.bf16.mxu0 0
        %353 = vmatpush1.bf16.msra.mxu0 0
        %354 = vmatprep.subr.bf16.mxu0 0
        %355 = vmatpush1.bf16.msra.mxu0 0
        %356 = vmatprep.subr.bf16.mxu0 0
        %357 = vmatpush1.bf16.msra.mxu0 0
        %358 = vmatprep.subr.bf16.mxu0 0
        %359 = vmatpush1.bf16.msra.mxu0 0
        %360 = vmatprep.subr.bf16.mxu0 0
        %361 = vmatpush1.bf16.msra.mxu0 0
        %362 = vmatprep.subr.bf16.mxu0 0
        %363 = vmatpush1.bf16.msra.mxu0 0
        %364 = vmatprep.subr.bf16.mxu0 0
        %365 = vmatpush1.bf16.msra.mxu0 0
        %366 = vmatprep.mubr.bf16.mxu0 0
        %367 = vmatmul.mubr.bf16.gmra.mrb[0].mxu0 %v332
        %v368 = vpop.f32.mrb[0].mxu0
        %v369 = vadd.f32 %v302, %v368
        %v370 = vpop.f32.mrb[0].mxu0
        %v371 = vadd.f32 %v306, %v370
        %v372 = vpop.f32.mrb[0].mxu0
        %v373 = vpop.f32.mrb[0].mxu0
        %374 = vdwg.mxu0
        %375 = vmatprep.subr.bf16.mxu0 0
        %376 = vmatpush1.bf16.msra.mxu0 %v326
        %377 = vmatprep.subr.bf16.mxu0 0
        %378 = vmatpush1.bf16.msra.mxu0 0
        %379 = vmatprep.subr.bf16.mxu0 0
        %380 = vmatpush1.bf16.msra.mxu0 0
        %381 = vmatprep.subr.bf16.mxu0 0
        %382 = vmatpush1.bf16.msra.mxu0 0
        %383 = vmatprep.subr.bf16.mxu0 0
        %384 = vmatpush1.bf16.msra.mxu0 0
        %385 = vmatprep.subr.bf16.mxu0 0
        %386 = vmatpush1.bf16.msra.mxu0 0
        %387 = vmatprep.subr.bf16.mxu0 0
        %388 = vmatpush1.bf16.msra.mxu0 0
        %389 = vmatprep.subr.bf16.mxu0 0
        %390 = vmatpush1.bf16.msra.mxu0 0
        %391 = vmatprep.subr.bf16.mxu0 0
        %392 = vmatpush1.bf16.msra.mxu0 0
        %393 = vmatprep.subr.bf16.mxu0 0
        %394 = vmatpush1.bf16.msra.mxu0 0
        %395 = vmatprep.subr.bf16.mxu0 0
        %396 = vmatpush1.bf16.msra.mxu0 0
        %397 = vmatprep.subr.bf16.mxu0 0
        %398 = vmatpush1.bf16.msra.mxu0 0
        %399 = vmatprep.subr.bf16.mxu0 0
        %400 = vmatpush1.bf16.msra.mxu0 0
        %401 = vmatprep.subr.bf16.mxu0 0
        %402 = vmatpush1.bf16.msra.mxu0 0
        %403 = vmatprep.subr.bf16.mxu0 0
        %404 = vmatpush1.bf16.msra.mxu0 0
        %405 = vmatprep.subr.bf16.mxu0 0
        %406 = vmatpush1.bf16.msra.mxu0 0
        %407 = vmatprep.mubr.bf16.mxu0 0
        %408 = vmatmul.mubr.bf16.gmra.mrb[0].mxu0 %v332
        %v409 = vpop.f32.mrb[0].mxu0
        %v410 = vadd.f32 %v310, %v409
        %v411 = vpop.f32.mrb[0].mxu0
        %v412 = vpop.f32.mrb[0].mxu0
        %v413 = vpop.f32.mrb[0].mxu0
        %414 = vdwg.mxu0
        %415 = vst [vmem:[#allocation3] sm:$0xff] %v369
        %416 = vst [vmem:[#allocation3 + $0x8] sm:$0xff] %v371
        %417 = vst [vmem:[#allocation3 + $0x10] sm:$0xff] %v410
        %v418 = vld [vmem:[%s4] sm:$0x1]
        %v419 = vld [vmem:[#allocation2] sm:$0x1]
        %v420 = vld [vmem:[#allocation3] ss:$8 sm:$0x7]
        %v421 = vpack.c.bf16 %v419, %v419
        %v422 = vld [vmem:[#allocation9] sm:$0xff]
        %v423 = vld [vmem:[#allocation9 + $0x8] sm:$0xf]
        %v424 = vld [vmem:[#allocation9 + $0xc] sm:$0xff]
        %v425 = vld [vmem:[#allocation9 + $0x14] sm:$0xf]
        %v426 = vld [vmem:[#allocation9 + $0x18] sm:$0xff]
        %v427 = vld [vmem:[#allocation9 + $0x20] sm:$0xf]
        %v428 = vld [vmem:[#allocation9 + $0x24] sm:$0xff]
        %v429 = vld [vmem:[#allocation9 + $0x2c] sm:$0xf]
        %v430 = vld [vmem:[#allocation9 + $0x30] sm:$0xff]
        %v431 = vld [vmem:[#allocation9 + $0x38] sm:$0xf]
        %v432 = vld [vmem:[#allocation9 + $0x3c] sm:$0xff]
        %v433 = vld [vmem:[#allocation9 + $0x44] sm:$0xf]
        %v434 = vld [vmem:[#allocation9 + $0x48] sm:$0xff]
        %v435 = vld [vmem:[#allocation9 + $0x50] sm:$0xf]
        %v436 = vld [vmem:[#allocation9 + $0x54] sm:$0xff]
        %v437 = vld [vmem:[#allocation9 + $0x5c] sm:$0xf]
        %v438 = vld [vmem:[#allocation9 + $0x60] sm:$0xff]
        %v439 = vld [vmem:[#allocation9 + $0x68] sm:$0xf]
        %v440 = vld [vmem:[#allocation9 + $0x6c] sm:$0xff]
        %v441 = vld [vmem:[#allocation9 + $0x74] sm:$0xf]
        %v442 = vld [vmem:[#allocation9 + $0x78] sm:$0xff]
        %v443 = vld [vmem:[#allocation9 + $0x80] sm:$0xf]
        %v444 = vld [vmem:[#allocation9 + $0x84] sm:$0xff]
        %v445 = vld [vmem:[#allocation9 + $0x8c] sm:$0xf]
        %v446 = vld [vmem:[#allocation9 + $0x90] sm:$0xff]
        %v447 = vld [vmem:[#allocation9 + $0x98] sm:$0xf]
        %v448 = vld [vmem:[#allocation9 + $0x9c] sm:$0xff]
        %v449 = vld [vmem:[#allocation9 + $0xa4] sm:$0xf]
        %v450 = vld [vmem:[#allocation9 + $0xa8] sm:$0xff]
        %v451 = vld [vmem:[#allocation9 + $0xb0] sm:$0xf]
        %v452 = vld [vmem:[#allocation9 + $0xb4] sm:$0xff]
        %v453 = vld [vmem:[#allocation9 + $0xbc] sm:$0xf]
        %v486 = vunpack.c.l.b16 %v422
        %v487 = vunpack.c.h.b16 %v422
        %v488 = vunpack.c.l.b16 %v423
        %v489 = vunpack.c.l.b16 %v424
        %v490 = vunpack.c.h.b16 %v424
        %v491 = vunpack.c.l.b16 %v425
        %v492 = vunpack.c.l.b16 %v426
        %v493 = vunpack.c.h.b16 %v426
        %v494 = vunpack.c.l.b16 %v427
        %v495 = vunpack.c.l.b16 %v428
        %v496 = vunpack.c.h.b16 %v428
        %v497 = vunpack.c.l.b16 %v429
        %v498 = vunpack.c.l.b16 %v430
        %v499 = vunpack.c.h.b16 %v430
        %v500 = vunpack.c.l.b16 %v431
        %v501 = vunpack.c.l.b16 %v432
        %v502 = vunpack.c.h.b16 %v432
        %v503 = vunpack.c.l.b16 %v433
        %v504 = vunpack.c.l.b16 %v434
        %v505 = vunpack.c.h.b16 %v434
        %v506 = vunpack.c.l.b16 %v435
        %v507 = vunpack.c.l.b16 %v436
        %v508 = vunpack.c.h.b16 %v436
        %v509 = vunpack.c.l.b16 %v437
        %v510 = vunpack.c.l.b16 %v438
        %v511 = vunpack.c.h.b16 %v438
        %v512 = vunpack.c.l.b16 %v439
        %v513 = vunpack.c.l.b16 %v440
        %v514 = vunpack.c.h.b16 %v440
        %v515 = vunpack.c.l.b16 %v441
        %v516 = vunpack.c.l.b16 %v442
        %v517 = vunpack.c.h.b16 %v442
        %v518 = vunpack.c.l.b16 %v443
        %v519 = vunpack.c.l.b16 %v444
        %v520 = vunpack.c.h.b16 %v444
        %v521 = vunpack.c.l.b16 %v445
        %v522 = vunpack.c.l.b16 %v446
        %v523 = vunpack.c.h.b16 %v446
        %v524 = vunpack.c.l.b16 %v447
        %v525 = vunpack.c.l.b16 %v448
        %v526 = vunpack.c.h.b16 %v448
        %v527 = vunpack.c.l.b16 %v449
        %v528 = vunpack.c.l.b16 %v450
        %v529 = vunpack.c.h.b16 %v450
        %v530 = vunpack.c.l.b16 %v451
        %v531 = vunpack.c.l.b16 %v452
        %v532 = vunpack.c.h.b16 %v452
        %v533 = vunpack.c.l.b16 %v453
        %v534 = vpack.c.b16 %v489, %v486
        %v535 = vpack.c.b16 %v490, %v487
        %v536 = vpack.c.b16 %v491, %v488
        %v537 = vpack.c.b16 %v495, %v492
        %v538 = vpack.c.b16 %v496, %v493
        %v539 = vpack.c.b16 %v497, %v494
        %v540 = vpack.c.b16 %v501, %v498
        %v541 = vpack.c.b16 %v502, %v499
        %v542 = vpack.c.b16 %v503, %v500
        %v543 = vpack.c.b16 %v507, %v504
        %v544 = vpack.c.b16 %v508, %v505
        %v545 = vpack.c.b16 %v509, %v506
        %v546 = vpack.c.b16 %v513, %v510
        %v547 = vpack.c.b16 %v514, %v511
        %v548 = vpack.c.b16 %v515, %v512
        %v549 = vpack.c.b16 %v519, %v516
        %v550 = vpack.c.b16 %v520, %v517
        %v551 = vpack.c.b16 %v521, %v518
        %v552 = vpack.c.b16 %v525, %v522
        %v553 = vpack.c.b16 %v526, %v523
        %v554 = vpack.c.b16 %v527, %v524
        %v555 = vpack.c.b16 %v531, %v528
        %v556 = vpack.c.b16 %v532, %v529
        %v557 = vpack.c.b16 %v533, %v530
        %582 = vmatprep.subr.bf16.mxu0 %v535
        %583 = vmatpush1.bf16.msra.mxu0 %v534
        %584 = vmatprep.subr.bf16.mxu0 %v538
        %585 = vmatpush1.bf16.msra.mxu0 %v537
        %586 = vmatprep.subr.bf16.mxu0 %v541
        %587 = vmatpush1.bf16.msra.mxu0 %v540
        %588 = vmatprep.subr.bf16.mxu0 %v544
        %589 = vmatpush1.bf16.msra.mxu0 %v543
        %590 = vmatprep.subr.bf16.mxu0 %v547
        %591 = vmatpush1.bf16.msra.mxu0 %v546
        %592 = vmatprep.subr.bf16.mxu0 %v550
        %593 = vmatpush1.bf16.msra.mxu0 %v549
        %594 = vmatprep.subr.bf16.mxu0 %v553
        %595 = vmatpush1.bf16.msra.mxu0 %v552
        %596 = vmatprep.subr.bf16.mxu0 %v556
        %597 = vmatpush1.bf16.msra.mxu0 %v555
        %598 = vmatprep.subr.bf16.mxu0 0
        %599 = vmatpush1.bf16.msra.mxu0 0
        %600 = vmatprep.subr.bf16.mxu0 0
        %601 = vmatpush1.bf16.msra.mxu0 0
        %602 = vmatprep.subr.bf16.mxu0 0
        %603 = vmatpush1.bf16.msra.mxu0 0
        %604 = vmatprep.subr.bf16.mxu0 0
        %605 = vmatpush1.bf16.msra.mxu0 0
        %606 = vmatprep.subr.bf16.mxu0 0
        %607 = vmatpush1.bf16.msra.mxu0 0
        %608 = vmatprep.subr.bf16.mxu0 0
        %609 = vmatpush1.bf16.msra.mxu0 0
        %610 = vmatprep.subr.bf16.mxu0 0
        %611 = vmatpush1.bf16.msra.mxu0 0
        %612 = vmatprep.subr.bf16.mxu0 0
        %613 = vmatpush1.bf16.msra.mxu0 0
        %614 = vmatprep.mubr.bf16.mxu0 0
        %615 = vmatmul.mubr.bf16.gmra.mrb[0].mxu0 %v421
        %v616 = vpop.f32.mrb[0].mxu0
        %v617 = vadd.f32 0.0, %v616
        %v618 = vpop.f32.mrb[0].mxu0
        %v619 = vadd.f32 0.0, %v618
        %v620 = vpop.f32.mrb[0].mxu0
        %v621 = vpop.f32.mrb[0].mxu0
        %622 = vdwg.mxu0
        %623 = vmatprep.subr.bf16.mxu0 0
        %624 = vmatpush1.bf16.msra.mxu0 %v536
        %625 = vmatprep.subr.bf16.mxu0 0
        %626 = vmatpush1.bf16.msra.mxu0 %v539
        %627 = vmatprep.subr.bf16.mxu0 0
        %628 = vmatpush1.bf16.msra.mxu0 %v542
        %629 = vmatprep.subr.bf16.mxu0 0
        %630 = vmatpush1.bf16.msra.mxu0 %v545
        %631 = vmatprep.subr.bf16.mxu0 0
        %632 = vmatpush1.bf16.msra.mxu0 %v548
        %633 = vmatprep.subr.bf16.mxu0 0
        %634 = vmatpush1.bf16.msra.mxu0 %v551
        %635 = vmatprep.subr.bf16.mxu0 0
        %636 = vmatpush1.bf16.msra.mxu0 %v554
        %637 = vmatprep.subr.bf16.mxu0 0
        %638 = vmatpush1.bf16.msra.mxu0 %v557
        %639 = vmatprep.subr.bf16.mxu0 0
        %640 = vmatpush1.bf16.msra.mxu0 0
        %641 = vmatprep.subr.bf16.mxu0 0
        %642 = vmatpush1.bf16.msra.mxu0 0
        %643 = vmatprep.subr.bf16.mxu0 0
        %644 = vmatpush1.bf16.msra.mxu0 0
        %645 = vmatprep.subr.bf16.mxu0 0
        %646 = vmatpush1.bf16.msra.mxu0 0
        %647 = vmatprep.subr.bf16.mxu0 0
        %648 = vmatpush1.bf16.msra.mxu0 0
        %649 = vmatprep.subr.bf16.mxu0 0
        %650 = vmatpush1.bf16.msra.mxu0 0
        %651 = vmatprep.subr.bf16.mxu0 0
        %652 = vmatpush1.bf16.msra.mxu0 0
        %653 = vmatprep.subr.bf16.mxu0 0
        %654 = vmatpush1.bf16.msra.mxu0 0
        %655 = vmatprep.mubr.bf16.mxu0 0
        %656 = vmatmul.mubr.bf16.gmra.mrb[0].mxu0 %v421
        %v657 = vpop.f32.mrb[0].mxu0
        %v658 = vadd.f32 0.0, %v657
        %v659 = vpop.f32.mrb[0].mxu0
        %v660 = vpop.f32.mrb[0].mxu0
        %v661 = vpop.f32.mrb[0].mxu0
        %662 = vdwg.mxu0
        %v663 = vadd.f32 %v420, %v617
        %v664 = vxor.u32 %v663, 2147483648
        %v665 = vmul.f32 %v664, 1.442695
        %v666 = vpow.pop %v665
        %v667 = vadd.f32 %v666, 1.0
        %v668 = vrcp.pop %v667
        %v669 = vmul.f32 1.0, %v668
        %v671 = vrot.slane %v420, 1
        %v673 = vadd.f32 %v671, %v619
        %v674 = vxor.u32 %v673, 2147483648
        %v675 = vmul.f32 %v674, 1.442695
        %v676 = vpow.pop %v675
        %v677 = vadd.f32 %v676, 1.0
        %v678 = vrcp.pop %v677
        %v679 = vmul.f32 1.0, %v678
        %v680 = vadd.f32 %v658, %v418
        %v681 = vmul.f32 %v669, %v680
        %v682 = vrot.slane %v420, 2
        %v684 = vadd.f32 %v682, %v681
        %v685 = vtanh.pop %v684
        %v686 = vsub.f32 %v419, %v685
        %v687 = vmul.f32 %v679, %v686
        %v688 = vadd.f32 %v685, %v687
        %689 = vst [vmem:[%s285] sm:$0x1] %v688
        %s690 = scalar_lea.vmem [#allocation3], 1
        %v691 = vld [vmem:[%s690] ss:$8 sm:$0x7]
        %v692 = vpack.c.bf16 %v688, %v688
        %v693 = vld [vmem:[#allocation9] sm:$0xff]
        %v694 = vld [vmem:[#allocation9 + $0x8] sm:$0xf]
        %v695 = vld [vmem:[#allocation9 + $0xc] sm:$0xff]
        %v696 = vld [vmem:[#allocation9 + $0x14] sm:$0xf]
        %v697 = vld [vmem:[#allocation9 + $0x18] sm:$0xff]
        %v698 = vld [vmem:[#allocation9 + $0x20] sm:$0xf]
        %v699 = vld [vmem:[#allocation9 + $0x24] sm:$0xff]
        %v700 = vld [vmem:[#allocation9 + $0x2c] sm:$0xf]
        %v701 = vld [vmem:[#allocation9 + $0x30] sm:$0xff]
        %v702 = vld [vmem:[#allocation9 + $0x38] sm:$0xf]
        %v703 = vld [vmem:[#allocation9 + $0x3c] sm:$0xff]
        %v704 = vld [vmem:[#allocation9 + $0x44] sm:$0xf]
        %v705 = vld [vmem:[#allocation9 + $0x48] sm:$0xff]
        %v706 = vld [vmem:[#allocation9 + $0x50] sm:$0xf]
        %v707 = vld [vmem:[#allocation9 + $0x54] sm:$0xff]
        %v708 = vld [vmem:[#allocation9 + $0x5c] sm:$0xf]
        %v709 = vld [vmem:[#allocation9 + $0x60] sm:$0xff]
        %v710 = vld [vmem:[#allocation9 + $0x68] sm:$0xf]
        %v711 = vld [vmem:[#allocation9 + $0x6c] sm:$0xff]
        %v712 = vld [vmem:[#allocation9 + $0x74] sm:$0xf]
        %v713 = vld [vmem:[#allocation9 + $0x78] sm:$0xff]
        %v714 = vld [vmem:[#allocation9 + $0x80] sm:$0xf]
        %v715 = vld [vmem:[#allocation9 + $0x84] sm:$0xff]
        %v716 = vld [vmem:[#allocation9 + $0x8c] sm:$0xf]
        %v717 = vld [vmem:[#allocation9 + $0x90] sm:$0xff]
        %v718 = vld [vmem:[#allocation9 + $0x98] sm:$0xf]
        %v719 = vld [vmem:[#allocation9 + $0x9c] sm:$0xff]
        %v720 = vld [vmem:[#allocation9 + $0xa4] sm:$0xf]
        %v721 = vld [vmem:[#allocation9 + $0xa8] sm:$0xff]
        %v722 = vld [vmem:[#allocation9 + $0xb0] sm:$0xf]
        %v723 = vld [vmem:[#allocation9 + $0xb4] sm:$0xff]
        %v724 = vld [vmem:[#allocation9 + $0xbc] sm:$0xf]
        %v757 = vunpack.c.l.b16 %v693
        %v758 = vunpack.c.h.b16 %v693
        %v759 = vunpack.c.l.b16 %v694
        %v760 = vunpack.c.l.b16 %v695
        %v761 = vunpack.c.h.b16 %v695
        %v762 = vunpack.c.l.b16 %v696
        %v763 = vunpack.c.l.b16 %v697
        %v764 = vunpack.c.h.b16 %v697
        %v765 = vunpack.c.l.b16 %v698
        %v766 = vunpack.c.l.b16 %v699
        %v767 = vunpack.c.h.b16 %v699
        %v768 = vunpack.c.l.b16 %v700
        %v769 = vunpack.c.l.b16 %v701
        %v770 = vunpack.c.h.b16 %v701
        %v771 = vunpack.c.l.b16 %v702
        %v772 = vunpack.c.l.b16 %v703
        %v773 = vunpack.c.h.b16 %v703
        %v774 = vunpack.c.l.b16 %v704
        %v775 = vunpack.c.l.b16 %v705
        %v776 = vunpack.c.h.b16 %v705
        %v777 = vunpack.c.l.b16 %v706
        %v778 = vunpack.c.l.b16 %v707
        %v779 = vunpack.c.h.b16 %v707
        %v780 = vunpack.c.l.b16 %v708
        %v781 = vunpack.c.l.b16 %v709
        %v782 = vunpack.c.h.b16 %v709
        %v783 = vunpack.c.l.b16 %v710
        %v784 = vunpack.c.l.b16 %v711
        %v785 = vunpack.c.h.b16 %v711
        %v786 = vunpack.c.l.b16 %v712
        %v787 = vunpack.c.l.b16 %v713
        %v788 = vunpack.c.h.b16 %v713
        %v789 = vunpack.c.l.b16 %v714
        %v790 = vunpack.c.l.b16 %v715
        %v791 = vunpack.c.h.b16 %v715
        %v792 = vunpack.c.l.b16 %v716
        %v793 = vunpack.c.l.b16 %v717
        %v794 = vunpack.c.h.b16 %v717
        %v795 = vunpack.c.l.b16 %v718
        %v796 = vunpack.c.l.b16 %v719
        %v797 = vunpack.c.h.b16 %v719
        %v798 = vunpack.c.l.b16 %v720
        %v799 = vunpack.c.l.b16 %v721
        %v800 = vunpack.c.h.b16 %v721
        %v801 = vunpack.c.l.b16 %v722
        %v802 = vunpack.c.l.b16 %v723
        %v803 = vunpack.c.h.b16 %v723
        %v804 = vunpack.c.l.b16 %v724
        %v805 = vpack.c.b16 %v760, %v757
        %v806 = vpack.c.b16 %v761, %v758
        %v807 = vpack.c.b16 %v762, %v759
        %v808 = vpack.c.b16 %v766, %v763
        %v809 = vpack.c.b16 %v767, %v764
        %v810 = vpack.c.b16 %v768, %v765
        %v811 = vpack.c.b16 %v772, %v769
        %v812 = vpack.c.b16 %v773, %v770
        %v813 = vpack.c.b16 %v774, %v771
        %v814 = vpack.c.b16 %v778, %v775
        %v815 = vpack.c.b16 %v779, %v776
        %v816 = vpack.c.b16 %v780, %v777
        %v817 = vpack.c.b16 %v784, %v781
        %v818 = vpack.c.b16 %v785, %v782
        %v819 = vpack.c.b16 %v786, %v783
        %v820 = vpack.c.b16 %v790, %v787
        %v821 = vpack.c.b16 %v791, %v788
        %v822 = vpack.c.b16 %v792, %v789
        %v823 = vpack.c.b16 %v796, %v793
        %v824 = vpack.c.b16 %v797, %v794
        %v825 = vpack.c.b16 %v798, %v795
        %v826 = vpack.c.b16 %v802, %v799
        %v827 = vpack.c.b16 %v803, %v800
        %v828 = vpack.c.b16 %v804, %v801
        %853 = vmatprep.subr.bf16.mxu0 %v806
        %854 = vmatpush1.bf16.msra.mxu0 %v805
        %855 = vmatprep.subr.bf16.mxu0 %v809
        %856 = vmatpush1.bf16.msra.mxu0 %v808
        %857 = vmatprep.subr.bf16.mxu0 %v812
        %858 = vmatpush1.bf16.msra.mxu0 %v811
        %859 = vmatprep.subr.bf16.mxu0 %v815
        %860 = vmatpush1.bf16.msra.mxu0 %v814
        %861 = vmatprep.subr.bf16.mxu0 %v818
        %862 = vmatpush1.bf16.msra.mxu0 %v817
        %863 = vmatprep.subr.bf16.mxu0 %v821
        %864 = vmatpush1.bf16.msra.mxu0 %v820
        %865 = vmatprep.subr.bf16.mxu0 %v824
        %866 = vmatpush1.bf16.msra.mxu0 %v823
        %867 = vmatprep.subr.bf16.mxu0 %v827
        %868 = vmatpush1.bf16.msra.mxu0 %v826
        %869 = vmatprep.subr.bf16.mxu0 0
        %870 = vmatpush1.bf16.msra.mxu0 0
        %871 = vmatprep.subr.bf16.mxu0 0
        %872 = vmatpush1.bf16.msra.mxu0 0
        %873 = vmatprep.subr.bf16.mxu0 0
        %874 = vmatpush1.bf16.msra.mxu0 0
        %875 = vmatprep.subr.bf16.mxu0 0
        %876 = vmatpush1.bf16.msra.mxu0 0
        %877 = vmatprep.subr.bf16.mxu0 0
        %878 = vmatpush1.bf16.msra.mxu0 0
        %879 = vmatprep.subr.bf16.mxu0 0
        %880 = vmatpush1.bf16.msra.mxu0 0
        %881 = vmatprep.subr.bf16.mxu0 0
        %882 = vmatpush1.bf16.msra.mxu0 0
        %883 = vmatprep.subr.bf16.mxu0 0
        %884 = vmatpush1.bf16.msra.mxu0 0
        %885 = vmatprep.mubr.bf16.mxu0 0
        %886 = vmatmul.mubr.bf16.gmra.mrb[0].mxu0 %v692
        %v887 = vpop.f32.mrb[0].mxu0
        %v888 = vadd.f32 0.0, %v887
        %v889 = vpop.f32.mrb[0].mxu0
        %v890 = vadd.f32 0.0, %v889
        %v891 = vpop.f32.mrb[0].mxu0
        %v892 = vpop.f32.mrb[0].mxu0
        %893 = vdwg.mxu0
        %894 = vmatprep.subr.bf16.mxu0 0
        %895 = vmatpush1.bf16.msra.mxu0 %v807
        %896 = vmatprep.subr.bf16.mxu0 0
        %897 = vmatpush1.bf16.msra.mxu0 %v810
        %898 = vmatprep.subr.bf16.mxu0 0
        %899 = vmatpush1.bf16.msra.mxu0 %v813
        %900 = vmatprep.subr.bf16.mxu0 0
        %901 = vmatpush1.bf16.msra.mxu0 %v816
        %902 = vmatprep.subr.bf16.mxu0 0
        %903 = vmatpush1.bf16.msra.mxu0 %v819
        %904 = vmatprep.subr.bf16.mxu0 0
        %905 = vmatpush1.bf16.msra.mxu0 %v822
        %906 = vmatprep.subr.bf16.mxu0 0
        %907 = vmatpush1.bf16.msra.mxu0 %v825
        %908 = vmatprep.subr.bf16.mxu0 0
        %909 = vmatpush1.bf16.msra.mxu0 %v828
        %910 = vmatprep.subr.bf16.mxu0 0
        %911 = vmatpush1.bf16.msra.mxu0 0
        %912 = vmatprep.subr.bf16.mxu0 0
        %913 = vmatpush1.bf16.msra.mxu0 0
        %914 = vmatprep.subr.bf16.mxu0 0
        %915 = vmatpush1.bf16.msra.mxu0 0
        %916 = vmatprep.subr.bf16.mxu0 0
        %917 = vmatpush1.bf16.msra.mxu0 0
        %918 = vmatprep.subr.bf16.mxu0 0
        %919 = vmatpush1.bf16.msra.mxu0 0
        %920 = vmatprep.subr.bf16.mxu0 0
        %921 = vmatpush1.bf16.msra.mxu0 0
        %922 = vmatprep.subr.bf16.mxu0 0
        %923 = vmatpush1.bf16.msra.mxu0 0
        %924 = vmatprep.subr.bf16.mxu0 0
        %925 = vmatpush1.bf16.msra.mxu0 0
        %926 = vmatprep.mubr.bf16.mxu0 0
        %927 = vmatmul.mubr.bf16.gmra.mrb[0].mxu0 %v692
        %v928 = vpop.f32.mrb[0].mxu0
        %v929 = vadd.f32 0.0, %v928
        %v930 = vpop.f32.mrb[0].mxu0
        %v931 = vpop.f32.mrb[0].mxu0
        %v932 = vpop.f32.mrb[0].mxu0
        %933 = vdwg.mxu0
        %v934 = vadd.f32 %v691, %v888
        %v935 = vxor.u32 %v934, 2147483648
        %v936 = vmul.f32 %v935, 1.442695
        %v937 = vpow.pop %v936
        %v938 = vadd.f32 %v937, 1.0
        %v939 = vrcp.pop %v938
        %v940 = vmul.f32 1.0, %v939
        %v942 = vrot.slane %v691, 1
        %v944 = vadd.f32 %v942, %v890
        %v945 = vxor.u32 %v944, 2147483648
        %v946 = vmul.f32 %v945, 1.442695
        %v947 = vpow.pop %v946
        %v948 = vadd.f32 %v947, 1.0
        %v949 = vrcp.pop %v948
        %v950 = vmul.f32 1.0, %v949
        %v951 = vadd.f32 %v929, %v418
        %v952 = vmul.f32 %v940, %v951
        %v953 = vrot.slane %v691, 2
        %v955 = vadd.f32 %v953, %v952
        %v956 = vtanh.pop %v955
        %v957 = vsub.f32 %v688, %v956
        %v958 = vmul.f32 %v950, %v957
        %v959 = vadd.f32 %v956, %v958
        %960 = vst [vmem:[%s285 + $0x1] sm:$0x1] %v959
        %s961 = scalar_lea.vmem [#allocation3], 2
        %v962 = vld [vmem:[%s961] ss:$8 sm:$0x7]
        %v963 = vpack.c.bf16 %v959, %v959
        %v964 = vld [vmem:[#allocation9] sm:$0xff]
        %v965 = vld [vmem:[#allocation9 + $0x8] sm:$0xf]
        %v966 = vld [vmem:[#allocation9 + $0xc] sm:$0xff]
        %v967 = vld [vmem:[#allocation9 + $0x14] sm:$0xf]
        %v968 = vld [vmem:[#allocation9 + $0x18] sm:$0xff]
        %v969 = vld [vmem:[#allocation9 + $0x20] sm:$0xf]
        %v970 = vld [vmem:[#allocation9 + $0x24] sm:$0xff]
        %v971 = vld [vmem:[#allocation9 + $0x2c] sm:$0xf]
        %v972 = vld [vmem:[#allocation9 + $0x30] sm:$0xff]
        %v973 = vld [vmem:[#allocation9 + $0x38] sm:$0xf]
        %v974 = vld [vmem:[#allocation9 + $0x3c] sm:$0xff]
        %v975 = vld [vmem:[#allocation9 + $0x44] sm:$0xf]
        %v976 = vld [vmem:[#allocation9 + $0x48] sm:$0xff]
        %v977 = vld [vmem:[#allocation9 + $0x50] sm:$0xf]
        %v978 = vld [vmem:[#allocation9 + $0x54] sm:$0xff]
        %v979 = vld [vmem:[#allocation9 + $0x5c] sm:$0xf]
        %v980 = vld [vmem:[#allocation9 + $0x60] sm:$0xff]
        %v981 = vld [vmem:[#allocation9 + $0x68] sm:$0xf]
        %v982 = vld [vmem:[#allocation9 + $0x6c] sm:$0xff]
        %v983 = vld [vmem:[#allocation9 + $0x74] sm:$0xf]
        %v984 = vld [vmem:[#allocation9 + $0x78] sm:$0xff]
        %v985 = vld [vmem:[#allocation9 + $0x80] sm:$0xf]
        %v986 = vld [vmem:[#allocation9 + $0x84] sm:$0xff]
        %v987 = vld [vmem:[#allocation9 + $0x8c] sm:$0xf]
        %v988 = vld [vmem:[#allocation9 + $0x90] sm:$0xff]
        %v989 = vld [vmem:[#allocation9 + $0x98] sm:$0xf]
        %v990 = vld [vmem:[#allocation9 + $0x9c] sm:$0xff]
        %v991 = vld [vmem:[#allocation9 + $0xa4] sm:$0xf]
        %v992 = vld [vmem:[#allocation9 + $0xa8] sm:$0xff]
        %v993 = vld [vmem:[#allocation9 + $0xb0] sm:$0xf]
        %v994 = vld [vmem:[#allocation9 + $0xb4] sm:$0xff]
        %v995 = vld [vmem:[#allocation9 + $0xbc] sm:$0xf]
        %v1028 = vunpack.c.l.b16 %v964
        %v1029 = vunpack.c.h.b16 %v964
        %v1030 = vunpack.c.l.b16 %v965
        %v1031 = vunpack.c.l.b16 %v966
        %v1032 = vunpack.c.h.b16 %v966
        %v1033 = vunpack.c.l.b16 %v967
        %v1034 = vunpack.c.l.b16 %v968
        %v1035 = vunpack.c.h.b16 %v968
        %v1036 = vunpack.c.l.b16 %v969
        %v1037 = vunpack.c.l.b16 %v970
        %v1038 = vunpack.c.h.b16 %v970
        %v1039 = vunpack.c.l.b16 %v971
        %v1040 = vunpack.c.l.b16 %v972
        %v1041 = vunpack.c.h.b16 %v972
        %v1042 = vunpack.c.l.b16 %v973
        %v1043 = vunpack.c.l.b16 %v974
        %v1044 = vunpack.c.h.b16 %v974
        %v1045 = vunpack.c.l.b16 %v975
        %v1046 = vunpack.c.l.b16 %v976
        %v1047 = vunpack.c.h.b16 %v976
        %v1048 = vunpack.c.l.b16 %v977
        %v1049 = vunpack.c.l.b16 %v978
        %v1050 = vunpack.c.h.b16 %v978
        %v1051 = vunpack.c.l.b16 %v979
        %v1052 = vunpack.c.l.b16 %v980
        %v1053 = vunpack.c.h.b16 %v980
        %v1054 = vunpack.c.l.b16 %v981
        %v1055 = vunpack.c.l.b16 %v982
        %v1056 = vunpack.c.h.b16 %v982
        %v1057 = vunpack.c.l.b16 %v983
        %v1058 = vunpack.c.l.b16 %v984
        %v1059 = vunpack.c.h.b16 %v984
        %v1060 = vunpack.c.l.b16 %v985
        %v1061 = vunpack.c.l.b16 %v986
        %v1062 = vunpack.c.h.b16 %v986
        %v1063 = vunpack.c.l.b16 %v987
        %v1064 = vunpack.c.l.b16 %v988
        %v1065 = vunpack.c.h.b16 %v988
        %v1066 = vunpack.c.l.b16 %v989
        %v1067 = vunpack.c.l.b16 %v990
        %v1068 = vunpack.c.h.b16 %v990
        %v1069 = vunpack.c.l.b16 %v991
        %v1070 = vunpack.c.l.b16 %v992
        %v1071 = vunpack.c.h.b16 %v992
        %v1072 = vunpack.c.l.b16 %v993
        %v1073 = vunpack.c.l.b16 %v994
        %v1074 = vunpack.c.h.b16 %v994
        %v1075 = vunpack.c.l.b16 %v995
        %v1076 = vpack.c.b16 %v1031, %v1028
        %v1077 = vpack.c.b16 %v1032, %v1029
        %v1078 = vpack.c.b16 %v1033, %v1030
        %v1079 = vpack.c.b16 %v1037, %v1034
        %v1080 = vpack.c.b16 %v1038, %v1035
        %v1081 = vpack.c.b16 %v1039, %v1036
        %v1082 = vpack.c.b16 %v1043, %v1040
        %v1083 = vpack.c.b16 %v1044, %v1041
        %v1084 = vpack.c.b16 %v1045, %v1042
        %v1085 = vpack.c.b16 %v1049, %v1046
        %v1086 = vpack.c.b16 %v1050, %v1047
        %v1087 = vpack.c.b16 %v1051, %v1048
        %v1088 = vpack.c.b16 %v1055, %v1052
        %v1089 = vpack.c.b16 %v1056, %v1053
        %v1090 = vpack.c.b16 %v1057, %v1054
        %v1091 = vpack.c.b16 %v1061, %v1058
        %v1092 = vpack.c.b16 %v1062, %v1059
        %v1093 = vpack.c.b16 %v1063, %v1060
        %v1094 = vpack.c.b16 %v1067, %v1064
        %v1095 = vpack.c.b16 %v1068, %v1065
        %v1096 = vpack.c.b16 %v1069, %v1066
        %v1097 = vpack.c.b16 %v1073, %v1070
        %v1098 = vpack.c.b16 %v1074, %v1071
        %v1099 = vpack.c.b16 %v1075, %v1072
        %1124 = vmatprep.subr.bf16.mxu0 %v1077
        %1125 = vmatpush1.bf16.msra.mxu0 %v1076
        %1126 = vmatprep.subr.bf16.mxu0 %v1080
        %1127 = vmatpush1.bf16.msra.mxu0 %v1079
        %1128 = vmatprep.subr.bf16.mxu0 %v1083
        %1129 = vmatpush1.bf16.msra.mxu0 %v1082
        %1130 = vmatprep.subr.bf16.mxu0 %v1086
        %1131 = vmatpush1.bf16.msra.mxu0 %v1085
        %1132 = vmatprep.subr.bf16.mxu0 %v1089
        %1133 = vmatpush1.bf16.msra.mxu0 %v1088
        %1134 = vmatprep.subr.bf16.mxu0 %v1092
        %1135 = vmatpush1.bf16.msra.mxu0 %v1091
        %1136 = vmatprep.subr.bf16.mxu0 %v1095
        %1137 = vmatpush1.bf16.msra.mxu0 %v1094
        %1138 = vmatprep.subr.bf16.mxu0 %v1098
        %1139 = vmatpush1.bf16.msra.mxu0 %v1097
        %1140 = vmatprep.subr.bf16.mxu0 0
        %1141 = vmatpush1.bf16.msra.mxu0 0
        %1142 = vmatprep.subr.bf16.mxu0 0
        %1143 = vmatpush1.bf16.msra.mxu0 0
        %1144 = vmatprep.subr.bf16.mxu0 0
        %1145 = vmatpush1.bf16.msra.mxu0 0
        %1146 = vmatprep.subr.bf16.mxu0 0
        %1147 = vmatpush1.bf16.msra.mxu0 0
        %1148 = vmatprep.subr.bf16.mxu0 0
        %1149 = vmatpush1.bf16.msra.mxu0 0
        %1150 = vmatprep.subr.bf16.mxu0 0
        %1151 = vmatpush1.bf16.msra.mxu0 0
        %1152 = vmatprep.subr.bf16.mxu0 0
        %1153 = vmatpush1.bf16.msra.mxu0 0
        %1154 = vmatprep.subr.bf16.mxu0 0
        %1155 = vmatpush1.bf16.msra.mxu0 0
        %1156 = vmatprep.mubr.bf16.mxu0 0
        %1157 = vmatmul.mubr.bf16.gmra.mrb[0].mxu0 %v963
        %v1158 = vpop.f32.mrb[0].mxu0
        %v1159 = vadd.f32 0.0, %v1158
        %v1160 = vpop.f32.mrb[0].mxu0
        %v1161 = vadd.f32 0.0, %v1160
        %v1162 = vpop.f32.mrb[0].mxu0
        %v1163 = vpop.f32.mrb[0].mxu0
        %1164 = vdwg.mxu0
        %1165 = vmatprep.subr.bf16.mxu0 0
        %1166 = vmatpush1.bf16.msra.mxu0 %v1078
        %1167 = vmatprep.subr.bf16.mxu0 0
        %1168 = vmatpush1.bf16.msra.mxu0 %v1081
        %1169 = vmatprep.subr.bf16.mxu0 0
        %1170 = vmatpush1.bf16.msra.mxu0 %v1084
        %1171 = vmatprep.subr.bf16.mxu0 0
        %1172 = vmatpush1.bf16.msra.mxu0 %v1087
        %1173 = vmatprep.subr.bf16.mxu0 0
        %1174 = vmatpush1.bf16.msra.mxu0 %v1090
        %1175 = vmatprep.subr.bf16.mxu0 0
        %1176 = vmatpush1.bf16.msra.mxu0 %v1093
        %1177 = vmatprep.subr.bf16.mxu0 0
        %1178 = vmatpush1.bf16.msra.mxu0 %v1096
        %1179 = vmatprep.subr.bf16.mxu0 0
        %1180 = vmatpush1.bf16.msra.mxu0 %v1099
        %1181 = vmatprep.subr.bf16.mxu0 0
        %1182 = vmatpush1.bf16.msra.mxu0 0
        %1183 = vmatprep.subr.bf16.mxu0 0
        %1184 = vmatpush1.bf16.msra.mxu0 0
        %1185 = vmatprep.subr.bf16.mxu0 0
        %1186 = vmatpush1.bf16.msra.mxu0 0
        %1187 = vmatprep.subr.bf16.mxu0 0
        %1188 = vmatpush1.bf16.msra.mxu0 0
        %1189 = vmatprep.subr.bf16.mxu0 0
        %1190 = vmatpush1.bf16.msra.mxu0 0
        %1191 = vmatprep.subr.bf16.mxu0 0
        %1192 = vmatpush1.bf16.msra.mxu0 0
        %1193 = vmatprep.subr.bf16.mxu0 0
        %1194 = vmatpush1.bf16.msra.mxu0 0
        %1195 = vmatprep.subr.bf16.mxu0 0
        %1196 = vmatpush1.bf16.msra.mxu0 0
        %1197 = vmatprep.mubr.bf16.mxu0 0
        %1198 = vmatmul.mubr.bf16.gmra.mrb[0].mxu0 %v963
        %v1199 = vpop.f32.mrb[0].mxu0
        %v1200 = vadd.f32 0.0, %v1199
        %v1201 = vpop.f32.mrb[0].mxu0
        %v1202 = vpop.f32.mrb[0].mxu0
        %v1203 = vpop.f32.mrb[0].mxu0
        %1204 = vdwg.mxu0
        %v1205 = vadd.f32 %v962, %v1159
        %v1206 = vxor.u32 %v1205, 2147483648
        %v1207 = vmul.f32 %v1206, 1.442695
        %v1208 = vpow.pop %v1207
        %v1209 = vadd.f32 %v1208, 1.0
        %v1210 = vrcp.pop %v1209
        %v1211 = vmul.f32 1.0, %v1210
        %v1213 = vrot.slane %v962, 1
        %v1215 = vadd.f32 %v1213, %v1161
        %v1216 = vxor.u32 %v1215, 2147483648
        %v1217 = vmul.f32 %v1216, 1.442695
        %v1218 = vpow.pop %v1217
        %v1219 = vadd.f32 %v1218, 1.0
        %v1220 = vrcp.pop %v1219
        %v1221 = vmul.f32 1.0, %v1220
        %v1222 = vadd.f32 %v1200, %v418
        %v1223 = vmul.f32 %v1211, %v1222
        %v1224 = vrot.slane %v962, 2
        %v1226 = vadd.f32 %v1224, %v1223
        %v1227 = vtanh.pop %v1226
        %v1228 = vsub.f32 %v959, %v1227
        %v1229 = vmul.f32 %v1221, %v1228
        %v1230 = vadd.f32 %v1227, %v1229
        %1231 = vst [vmem:[%s285 + $0x2] sm:$0x1] %v1230
        %s1232 = scalar_lea.vmem [#allocation3], 3
        %v1233 = vld [vmem:[%s1232] ss:$8 sm:$0x7]
        %v1234 = vpack.c.bf16 %v1230, %v1230
        %v1235 = vld [vmem:[#allocation9] sm:$0xff]
        %v1236 = vld [vmem:[#allocation9 + $0x8] sm:$0xf]
        %v1237 = vld [vmem:[#allocation9 + $0xc] sm:$0xff]
        %v1238 = vld [vmem:[#allocation9 + $0x14] sm:$0xf]
        %v1239 = vld [vmem:[#allocation9 + $0x18] sm:$0xff]
        %v1240 = vld [vmem:[#allocation9 + $0x20] sm:$0xf]
        %v1241 = vld [vmem:[#allocation9 + $0x24] sm:$0xff]
        %v1242 = vld [vmem:[#allocation9 + $0x2c] sm:$0xf]
        %v1243 = vld [vmem:[#allocation9 + $0x30] sm:$0xff]
        %v1244 = vld [vmem:[#allocation9 + $0x38] sm:$0xf]
        %v1245 = vld [vmem:[#allocation9 + $0x3c] sm:$0xff]
        %v1246 = vld [vmem:[#allocation9 + $0x44] sm:$0xf]
        %v1247 = vld [vmem:[#allocation9 + $0x48] sm:$0xff]
        %v1248 = vld [vmem:[#allocation9 + $0x50] sm:$0xf]
        %v1249 = vld [vmem:[#allocation9 + $0x54] sm:$0xff]
        %v1250 = vld [vmem:[#allocation9 + $0x5c] sm:$0xf]
        %v1251 = vld [vmem:[#allocation9 + $0x60] sm:$0xff]
        %v1252 = vld [vmem:[#allocation9 + $0x68] sm:$0xf]
        %v1253 = vld [vmem:[#allocation9 + $0x6c] sm:$0xff]
        %v1254 = vld [vmem:[#allocation9 + $0x74] sm:$0xf]
        %v1255 = vld [vmem:[#allocation9 + $0x78] sm:$0xff]
        %v1256 = vld [vmem:[#allocation9 + $0x80] sm:$0xf]
        %v1257 = vld [vmem:[#allocation9 + $0x84] sm:$0xff]
        %v1258 = vld [vmem:[#allocation9 + $0x8c] sm:$0xf]
        %v1259 = vld [vmem:[#allocation9 + $0x90] sm:$0xff]
        %v1260 = vld [vmem:[#allocation9 + $0x98] sm:$0xf]
        %v1261 = vld [vmem:[#allocation9 + $0x9c] sm:$0xff]
        %v1262 = vld [vmem:[#allocation9 + $0xa4] sm:$0xf]
        %v1263 = vld [vmem:[#allocation9 + $0xa8] sm:$0xff]
        %v1264 = vld [vmem:[#allocation9 + $0xb0] sm:$0xf]
        %v1265 = vld [vmem:[#allocation9 + $0xb4] sm:$0xff]
        %v1266 = vld [vmem:[#allocation9 + $0xbc] sm:$0xf]
        %v1299 = vunpack.c.l.b16 %v1235
        %v1300 = vunpack.c.h.b16 %v1235
        %v1301 = vunpack.c.l.b16 %v1236
        %v1302 = vunpack.c.l.b16 %v1237
        %v1303 = vunpack.c.h.b16 %v1237
        %v1304 = vunpack.c.l.b16 %v1238
        %v1305 = vunpack.c.l.b16 %v1239
        %v1306 = vunpack.c.h.b16 %v1239
        %v1307 = vunpack.c.l.b16 %v1240
        %v1308 = vunpack.c.l.b16 %v1241
        %v1309 = vunpack.c.h.b16 %v1241
        %v1310 = vunpack.c.l.b16 %v1242
        %v1311 = vunpack.c.l.b16 %v1243
        %v1312 = vunpack.c.h.b16 %v1243
        %v1313 = vunpack.c.l.b16 %v1244
        %v1314 = vunpack.c.l.b16 %v1245
        %v1315 = vunpack.c.h.b16 %v1245
        %v1316 = vunpack.c.l.b16 %v1246
        %v1317 = vunpack.c.l.b16 %v1247
        %v1318 = vunpack.c.h.b16 %v1247
        %v1319 = vunpack.c.l.b16 %v1248
        %v1320 = vunpack.c.l.b16 %v1249
        %v1321 = vunpack.c.h.b16 %v1249
        %v1322 = vunpack.c.l.b16 %v1250
        %v1323 = vunpack.c.l.b16 %v1251
        %v1324 = vunpack.c.h.b16 %v1251
        %v1325 = vunpack.c.l.b16 %v1252
        %v1326 = vunpack.c.l.b16 %v1253
        %v1327 = vunpack.c.h.b16 %v1253
        %v1328 = vunpack.c.l.b16 %v1254
        %v1329 = vunpack.c.l.b16 %v1255
        %v1330 = vunpack.c.h.b16 %v1255
        %v1331 = vunpack.c.l.b16 %v1256
        %v1332 = vunpack.c.l.b16 %v1257
        %v1333 = vunpack.c.h.b16 %v1257
        %v1334 = vunpack.c.l.b16 %v1258
        %v1335 = vunpack.c.l.b16 %v1259
        %v1336 = vunpack.c.h.b16 %v1259
        %v1337 = vunpack.c.l.b16 %v1260
        %v1338 = vunpack.c.l.b16 %v1261
        %v1339 = vunpack.c.h.b16 %v1261
        %v1340 = vunpack.c.l.b16 %v1262
        %v1341 = vunpack.c.l.b16 %v1263
        %v1342 = vunpack.c.h.b16 %v1263
        %v1343 = vunpack.c.l.b16 %v1264
        %v1344 = vunpack.c.l.b16 %v1265
        %v1345 = vunpack.c.h.b16 %v1265
        %v1346 = vunpack.c.l.b16 %v1266
        %v1347 = vpack.c.b16 %v1302, %v1299
        %v1348 = vpack.c.b16 %v1303, %v1300
        %v1349 = vpack.c.b16 %v1304, %v1301
        %v1350 = vpack.c.b16 %v1308, %v1305
        %v1351 = vpack.c.b16 %v1309, %v1306
        %v1352 = vpack.c.b16 %v1310, %v1307
        %v1353 = vpack.c.b16 %v1314, %v1311
        %v1354 = vpack.c.b16 %v1315, %v1312
        %v1355 = vpack.c.b16 %v1316, %v1313
        %v1356 = vpack.c.b16 %v1320, %v1317
        %v1357 = vpack.c.b16 %v1321, %v1318
        %v1358 = vpack.c.b16 %v1322, %v1319
        %v1359 = vpack.c.b16 %v1326, %v1323
        %v1360 = vpack.c.b16 %v1327, %v1324
        %v1361 = vpack.c.b16 %v1328, %v1325
        %v1362 = vpack.c.b16 %v1332, %v1329
        %v1363 = vpack.c.b16 %v1333, %v1330
        %v1364 = vpack.c.b16 %v1334, %v1331
        %v1365 = vpack.c.b16 %v1338, %v1335
        %v1366 = vpack.c.b16 %v1339, %v1336
        %v1367 = vpack.c.b16 %v1340, %v1337
        %v1368 = vpack.c.b16 %v1344, %v1341
        %v1369 = vpack.c.b16 %v1345, %v1342
        %v1370 = vpack.c.b16 %v1346, %v1343
        %1395 = vmatprep.subr.bf16.mxu0 %v1348
        %1396 = vmatpush1.bf16.msra.mxu0 %v1347
        %1397 = vmatprep.subr.bf16.mxu0 %v1351
        %1398 = vmatpush1.bf16.msra.mxu0 %v1350
        %1399 = vmatprep.subr.bf16.mxu0 %v1354
        %1400 = vmatpush1.bf16.msra.mxu0 %v1353
        %1401 = vmatprep.subr.bf16.mxu0 %v1357
        %1402 = vmatpush1.bf16.msra.mxu0 %v1356
        %1403 = vmatprep.subr.bf16.mxu0 %v1360
        %1404 = vmatpush1.bf16.msra.mxu0 %v1359
        %1405 = vmatprep.subr.bf16.mxu0 %v1363
        %1406 = vmatpush1.bf16.msra.mxu0 %v1362
        %1407 = vmatprep.subr.bf16.mxu0 %v1366
        %1408 = vmatpush1.bf16.msra.mxu0 %v1365
        %1409 = vmatprep.subr.bf16.mxu0 %v1369
        %1410 = vmatpush1.bf16.msra.mxu0 %v1368
        %1411 = vmatprep.subr.bf16.mxu0 0
        %1412 = vmatpush1.bf16.msra.mxu0 0
        %1413 = vmatprep.subr.bf16.mxu0 0
        %1414 = vmatpush1.bf16.msra.mxu0 0
        %1415 = vmatprep.subr.bf16.mxu0 0
        %1416 = vmatpush1.bf16.msra.mxu0 0
        %1417 = vmatprep.subr.bf16.mxu0 0
        %1418 = vmatpush1.bf16.msra.mxu0 0
        %1419 = vmatprep.subr.bf16.mxu0 0
        %1420 = vmatpush1.bf16.msra.mxu0 0
        %1421 = vmatprep.subr.bf16.mxu0 0
        %1422 = vmatpush1.bf16.msra.mxu0 0
        %1423 = vmatprep.subr.bf16.mxu0 0
        %1424 = vmatpush1.bf16.msra.mxu0 0
        %1425 = vmatprep.subr.bf16.mxu0 0
        %1426 = vmatpush1.bf16.msra.mxu0 0
        %1427 = vmatprep.mubr.bf16.mxu0 0
        %1428 = vmatmul.mubr.bf16.gmra.mrb[0].mxu0 %v1234
        %v1429 = vpop.f32.mrb[0].mxu0
        %v1430 = vadd.f32 0.0, %v1429
        %v1431 = vpop.f32.mrb[0].mxu0
        %v1432 = vadd.f32 0.0, %v1431
        %v1433 = vpop.f32.mrb[0].mxu0
        %v1434 = vpop.f32.mrb[0].mxu0
        %1435 = vdwg.mxu0
        %1436 = vmatprep.subr.bf16.mxu0 0
        %1437 = vmatpush1.bf16.msra.mxu0 %v1349
        %1438 = vmatprep.subr.bf16.mxu0 0
        %1439 = vmatpush1.bf16.msra.mxu0 %v1352
        %1440 = vmatprep.subr.bf16.mxu0 0
        %1441 = vmatpush1.bf16.msra.mxu0 %v1355
        %1442 = vmatprep.subr.bf16.mxu0 0
        %1443 = vmatpush1.bf16.msra.mxu0 %v1358
        %1444 = vmatprep.subr.bf16.mxu0 0
        %1445 = vmatpush1.bf16.msra.mxu0 %v1361
        %1446 = vmatprep.subr.bf16.mxu0 0
        %1447 = vmatpush1.bf16.msra.mxu0 %v1364
        %1448 = vmatprep.subr.bf16.mxu0 0
        %1449 = vmatpush1.bf16.msra.mxu0 %v1367
        %1450 = vmatprep.subr.bf16.mxu0 0
        %1451 = vmatpush1.bf16.msra.mxu0 %v1370
        %1452 = vmatprep.subr.bf16.mxu0 0
        %1453 = vmatpush1.bf16.msra.mxu0 0
        %1454 = vmatprep.subr.bf16.mxu0 0
        %1455 = vmatpush1.bf16.msra.mxu0 0
        %1456 = vmatprep.subr.bf16.mxu0 0
        %1457 = vmatpush1.bf16.msra.mxu0 0
        %1458 = vmatprep.subr.bf16.mxu0 0
        %1459 = vmatpush1.bf16.msra.mxu0 0
        %1460 = vmatprep.subr.bf16.mxu0 0
        %1461 = vmatpush1.bf16.msra.mxu0 0
        %1462 = vmatprep.subr.bf16.mxu0 0
        %1463 = vmatpush1.bf16.msra.mxu0 0
        %1464 = vmatprep.subr.bf16.mxu0 0
        %1465 = vmatpush1.bf16.msra.mxu0 0
        %1466 = vmatprep.subr.bf16.mxu0 0
        %1467 = vmatpush1.bf16.msra.mxu0 0
        %1468 = vmatprep.mubr.bf16.mxu0 0
        %1469 = vmatmul.mubr.bf16.gmra.mrb[0].mxu0 %v1234
        %v1470 = vpop.f32.mrb[0].mxu0
        %v1471 = vadd.f32 0.0, %v1470
        %v1472 = vpop.f32.mrb[0].mxu0
        %v1473 = vpop.f32.mrb[0].mxu0
        %v1474 = vpop.f32.mrb[0].mxu0
        %1475 = vdwg.mxu0
        %v1476 = vadd.f32 %v1233, %v1430
        %v1477 = vxor.u32 %v1476, 2147483648
        %v1478 = vmul.f32 %v1477, 1.442695
        %v1479 = vpow.pop %v1478
        %v1480 = vadd.f32 %v1479, 1.0
        %v1481 = vrcp.pop %v1480
        %v1482 = vmul.f32 1.0, %v1481
        %v1484 = vrot.slane %v1233, 1
        %v1486 = vadd.f32 %v1484, %v1432
        %v1487 = vxor.u32 %v1486, 2147483648
        %v1488 = vmul.f32 %v1487, 1.442695
        %v1489 = vpow.pop %v1488
        %v1490 = vadd.f32 %v1489, 1.0
        %v1491 = vrcp.pop %v1490
        %v1492 = vmul.f32 1.0, %v1491
        %v1493 = vadd.f32 %v1471, %v418
        %v1494 = vmul.f32 %v1482, %v1493
        %v1495 = vrot.slane %v1233, 2
        %v1497 = vadd.f32 %v1495, %v1494
        %v1498 = vtanh.pop %v1497
        %v1499 = vsub.f32 %v1230, %v1498
        %v1500 = vmul.f32 %v1492, %v1499
        %v1501 = vadd.f32 %v1498, %v1500
        %1502 = vst [vmem:[%s285 + $0x3] sm:$0x1] %v1501
        %s1503 = scalar_lea.vmem [#allocation3], 4
        %v1504 = vld [vmem:[%s1503] ss:$8 sm:$0x7]
        %v1505 = vpack.c.bf16 %v1501, %v1501
        %v1506 = vld [vmem:[#allocation9] sm:$0xff]
        %v1507 = vld [vmem:[#allocation9 + $0x8] sm:$0xf]
        %v1508 = vld [vmem:[#allocation9 + $0xc] sm:$0xff]
        %v1509 = vld [vmem:[#allocation9 + $0x14] sm:$0xf]
        %v1510 = vld [vmem:[#allocation9 + $0x18] sm:$0xff]
        %v1511 = vld [vmem:[#allocation9 + $0x20] sm:$0xf]
        %v1512 = vld [vmem:[#allocation9 + $0x24] sm:$0xff]
        %v1513 = vld [vmem:[#allocation9 + $0x2c] sm:$0xf]
        %v1514 = vld [vmem:[#allocation9 + $0x30] sm:$0xff]
        %v1515 = vld [vmem:[#allocation9 + $0x38] sm:$0xf]
        %v1516 = vld [vmem:[#allocation9 + $0x3c] sm:$0xff]
        %v1517 = vld [vmem:[#allocation9 + $0x44] sm:$0xf]
        %v1518 = vld [vmem:[#allocation9 + $0x48] sm:$0xff]
        %v1519 = vld [vmem:[#allocation9 + $0x50] sm:$0xf]
        %v1520 = vld [vmem:[#allocation9 + $0x54] sm:$0xff]
        %v1521 = vld [vmem:[#allocation9 + $0x5c] sm:$0xf]
        %v1522 = vld [vmem:[#allocation9 + $0x60] sm:$0xff]
        %v1523 = vld [vmem:[#allocation9 + $0x68] sm:$0xf]
        %v1524 = vld [vmem:[#allocation9 + $0x6c] sm:$0xff]
        %v1525 = vld [vmem:[#allocation9 + $0x74] sm:$0xf]
        %v1526 = vld [vmem:[#allocation9 + $0x78] sm:$0xff]
        %v1527 = vld [vmem:[#allocation9 + $0x80] sm:$0xf]
        %v1528 = vld [vmem:[#allocation9 + $0x84] sm:$0xff]
        %v1529 = vld [vmem:[#allocation9 + $0x8c] sm:$0xf]
        %v1530 = vld [vmem:[#allocation9 + $0x90] sm:$0xff]
        %v1531 = vld [vmem:[#allocation9 + $0x98] sm:$0xf]
        %v1532 = vld [vmem:[#allocation9 + $0x9c] sm:$0xff]
        %v1533 = vld [vmem:[#allocation9 + $0xa4] sm:$0xf]
        %v1534 = vld [vmem:[#allocation9 + $0xa8] sm:$0xff]
        %v1535 = vld [vmem:[#allocation9 + $0xb0] sm:$0xf]
        %v1536 = vld [vmem:[#allocation9 + $0xb4] sm:$0xff]
        %v1537 = vld [vmem:[#allocation9 + $0xbc] sm:$0xf]
        %v1570 = vunpack.c.l.b16 %v1506
        %v1571 = vunpack.c.h.b16 %v1506
        %v1572 = vunpack.c.l.b16 %v1507
        %v1573 = vunpack.c.l.b16 %v1508
        %v1574 = vunpack.c.h.b16 %v1508
        %v1575 = vunpack.c.l.b16 %v1509
        %v1576 = vunpack.c.l.b16 %v1510
        %v1577 = vunpack.c.h.b16 %v1510
        %v1578 = vunpack.c.l.b16 %v1511
        %v1579 = vunpack.c.l.b16 %v1512
        %v1580 = vunpack.c.h.b16 %v1512
        %v1581 = vunpack.c.l.b16 %v1513
        %v1582 = vunpack.c.l.b16 %v1514
        %v1583 = vunpack.c.h.b16 %v1514
        %v1584 = vunpack.c.l.b16 %v1515
        %v1585 = vunpack.c.l.b16 %v1516
        %v1586 = vunpack.c.h.b16 %v1516
        %v1587 = vunpack.c.l.b16 %v1517
        %v1588 = vunpack.c.l.b16 %v1518
        %v1589 = vunpack.c.h.b16 %v1518
        %v1590 = vunpack.c.l.b16 %v1519
        %v1591 = vunpack.c.l.b16 %v1520
        %v1592 = vunpack.c.h.b16 %v1520
        %v1593 = vunpack.c.l.b16 %v1521
        %v1594 = vunpack.c.l.b16 %v1522
        %v1595 = vunpack.c.h.b16 %v1522
        %v1596 = vunpack.c.l.b16 %v1523
        %v1597 = vunpack.c.l.b16 %v1524
        %v1598 = vunpack.c.h.b16 %v1524
        %v1599 = vunpack.c.l.b16 %v1525
        %v1600 = vunpack.c.l.b16 %v1526
        %v1601 = vunpack.c.h.b16 %v1526
        %v1602 = vunpack.c.l.b16 %v1527
        %v1603 = vunpack.c.l.b16 %v1528
        %v1604 = vunpack.c.h.b16 %v1528
        %v1605 = vunpack.c.l.b16 %v1529
        %v1606 = vunpack.c.l.b16 %v1530
        %v1607 = vunpack.c.h.b16 %v1530
        %v1608 = vunpack.c.l.b16 %v1531
        %v1609 = vunpack.c.l.b16 %v1532
        %v1610 = vunpack.c.h.b16 %v1532
        %v1611 = vunpack.c.l.b16 %v1533
        %v1612 = vunpack.c.l.b16 %v1534
        %v1613 = vunpack.c.h.b16 %v1534
        %v1614 = vunpack.c.l.b16 %v1535
        %v1615 = vunpack.c.l.b16 %v1536
        %v1616 = vunpack.c.h.b16 %v1536
        %v1617 = vunpack.c.l.b16 %v1537
        %v1618 = vpack.c.b16 %v1573, %v1570
        %v1619 = vpack.c.b16 %v1574, %v1571
        %v1620 = vpack.c.b16 %v1575, %v1572
        %v1621 = vpack.c.b16 %v1579, %v1576
        %v1622 = vpack.c.b16 %v1580, %v1577
        %v1623 = vpack.c.b16 %v1581, %v1578
        %v1624 = vpack.c.b16 %v1585, %v1582
        %v1625 = vpack.c.b16 %v1586, %v1583
        %v1626 = vpack.c.b16 %v1587, %v1584
        %v1627 = vpack.c.b16 %v1591, %v1588
        %v1628 = vpack.c.b16 %v1592, %v1589
        %v1629 = vpack.c.b16 %v1593, %v1590
        %v1630 = vpack.c.b16 %v1597, %v1594
        %v1631 = vpack.c.b16 %v1598, %v1595
        %v1632 = vpack.c.b16 %v1599, %v1596
        %v1633 = vpack.c.b16 %v1603, %v1600
        %v1634 = vpack.c.b16 %v1604, %v1601
        %v1635 = vpack.c.b16 %v1605, %v1602
        %v1636 = vpack.c.b16 %v1609, %v1606
        %v1637 = vpack.c.b16 %v1610, %v1607
        %v1638 = vpack.c.b16 %v1611, %v1608
        %v1639 = vpack.c.b16 %v1615, %v1612
        %v1640 = vpack.c.b16 %v1616, %v1613
        %v1641 = vpack.c.b16 %v1617, %v1614
        %1666 = vmatprep.subr.bf16.mxu0 %v1619
        %1667 = vmatpush1.bf16.msra.mxu0 %v1618
        %1668 = vmatprep.subr.bf16.mxu0 %v1622
        %1669 = vmatpush1.bf16.msra.mxu0 %v1621
        %1670 = vmatprep.subr.bf16.mxu0 %v1625
        %1671 = vmatpush1.bf16.msra.mxu0 %v1624
        %1672 = vmatprep.subr.bf16.mxu0 %v1628
        %1673 = vmatpush1.bf16.msra.mxu0 %v1627
        %1674 = vmatprep.subr.bf16.mxu0 %v1631
        %1675 = vmatpush1.bf16.msra.mxu0 %v1630
        %1676 = vmatprep.subr.bf16.mxu0 %v1634
        %1677 = vmatpush1.bf16.msra.mxu0 %v1633
        %1678 = vmatprep.subr.bf16.mxu0 %v1637
        %1679 = vmatpush1.bf16.msra.mxu0 %v1636
        %1680 = vmatprep.subr.bf16.mxu0 %v1640
        %1681 = vmatpush1.bf16.msra.mxu0 %v1639
        %1682 = vmatprep.subr.bf16.mxu0 0
        %1683 = vmatpush1.bf16.msra.mxu0 0
        %1684 = vmatprep.subr.bf16.mxu0 0
        %1685 = vmatpush1.bf16.msra.mxu0 0
        %1686 = vmatprep.subr.bf16.mxu0 0
        %1687 = vmatpush1.bf16.msra.mxu0 0
        %1688 = vmatprep.subr.bf16.mxu0 0
        %1689 = vmatpush1.bf16.msra.mxu0 0
        %1690 = vmatprep.subr.bf16.mxu0 0
        %1691 = vmatpush1.bf16.msra.mxu0 0
        %1692 = vmatprep.subr.bf16.mxu0 0
        %1693 = vmatpush1.bf16.msra.mxu0 0
        %1694 = vmatprep.subr.bf16.mxu0 0
        %1695 = vmatpush1.bf16.msra.mxu0 0
        %1696 = vmatprep.subr.bf16.mxu0 0
        %1697 = vmatpush1.bf16.msra.mxu0 0
        %1698 = vmatprep.mubr.bf16.mxu0 0
        %1699 = vmatmul.mubr.bf16.gmra.mrb[0].mxu0 %v1505
        %v1700 = vpop.f32.mrb[0].mxu0
        %v1701 = vadd.f32 0.0, %v1700
        %v1702 = vpop.f32.mrb[0].mxu0
        %v1703 = vadd.f32 0.0, %v1702
        %v1704 = vpop.f32.mrb[0].mxu0
        %v1705 = vpop.f32.mrb[0].mxu0
        %1706 = vdwg.mxu0
        %1707 = vmatprep.subr.bf16.mxu0 0
        %1708 = vmatpush1.bf16.msra.mxu0 %v1620
        %1709 = vmatprep.subr.bf16.mxu0 0
        %1710 = vmatpush1.bf16.msra.mxu0 %v1623
        %1711 = vmatprep.subr.bf16.mxu0 0
        %1712 = vmatpush1.bf16.msra.mxu0 %v1626
        %1713 = vmatprep.subr.bf16.mxu0 0
        %1714 = vmatpush1.bf16.msra.mxu0 %v1629
        %1715 = vmatprep.subr.bf16.mxu0 0
        %1716 = vmatpush1.bf16.msra.mxu0 %v1632
        %1717 = vmatprep.subr.bf16.mxu0 0
        %1718 = vmatpush1.bf16.msra.mxu0 %v1635
        %1719 = vmatprep.subr.bf16.mxu0 0
        %1720 = vmatpush1.bf16.msra.mxu0 %v1638
        %1721 = vmatprep.subr.bf16.mxu0 0
        %1722 = vmatpush1.bf16.msra.mxu0 %v1641
        %1723 = vmatprep.subr.bf16.mxu0 0
        %1724 = vmatpush1.bf16.msra.mxu0 0
        %1725 = vmatprep.subr.bf16.mxu0 0
        %1726 = vmatpush1.bf16.msra.mxu0 0
        %1727 = vmatprep.subr.bf16.mxu0 0
        %1728 = vmatpush1.bf16.msra.mxu0 0
        %1729 = vmatprep.subr.bf16.mxu0 0
        %1730 = vmatpush1.bf16.msra.mxu0 0
        %1731 = vmatprep.subr.bf16.mxu0 0
        %1732 = vmatpush1.bf16.msra.mxu0 0
        %1733 = vmatprep.subr.bf16.mxu0 0
        %1734 = vmatpush1.bf16.msra.mxu0 0
        %1735 = vmatprep.subr.bf16.mxu0 0
        %1736 = vmatpush1.bf16.msra.mxu0 0
        %1737 = vmatprep.subr.bf16.mxu0 0
        %1738 = vmatpush1.bf16.msra.mxu0 0
        %1739 = vmatprep.mubr.bf16.mxu0 0
        %1740 = vmatmul.mubr.bf16.gmra.mrb[0].mxu0 %v1505
        %v1741 = vpop.f32.mrb[0].mxu0
        %v1742 = vadd.f32 0.0, %v1741
        %v1743 = vpop.f32.mrb[0].mxu0
        %v1744 = vpop.f32.mrb[0].mxu0
        %v1745 = vpop.f32.mrb[0].mxu0
        %1746 = vdwg.mxu0
        %v1747 = vadd.f32 %v1504, %v1701
        %v1748 = vxor.u32 %v1747, 2147483648
        %v1749 = vmul.f32 %v1748, 1.442695
        %v1750 = vpow.pop %v1749
        %v1751 = vadd.f32 %v1750, 1.0
        %v1752 = vrcp.pop %v1751
        %v1753 = vmul.f32 1.0, %v1752
        %v1755 = vrot.slane %v1504, 1
        %v1757 = vadd.f32 %v1755, %v1703
        %v1758 = vxor.u32 %v1757, 2147483648
        %v1759 = vmul.f32 %v1758, 1.442695
        %v1760 = vpow.pop %v1759
        %v1761 = vadd.f32 %v1760, 1.0
        %v1762 = vrcp.pop %v1761
        %v1763 = vmul.f32 1.0, %v1762
        %v1764 = vadd.f32 %v1742, %v418
        %v1765 = vmul.f32 %v1753, %v1764
        %v1766 = vrot.slane %v1504, 2
        %v1768 = vadd.f32 %v1766, %v1765
        %v1769 = vtanh.pop %v1768
        %v1770 = vsub.f32 %v1501, %v1769
        %v1771 = vmul.f32 %v1763, %v1770
        %v1772 = vadd.f32 %v1769, %v1771
        %1773 = vst [vmem:[%s285 + $0x4] sm:$0x1] %v1772
        %s1774 = scalar_lea.vmem [#allocation3], 5
        %v1775 = vld [vmem:[%s1774] ss:$8 sm:$0x7]
        %v1776 = vpack.c.bf16 %v1772, %v1772
        %v1777 = vld [vmem:[#allocation9] sm:$0xff]
        %v1778 = vld [vmem:[#allocation9 + $0x8] sm:$0xf]
        %v1779 = vld [vmem:[#allocation9 + $0xc] sm:$0xff]
        %v1780 = vld [vmem:[#allocation9 + $0x14] sm:$0xf]
        %v1781 = vld [vmem:[#allocation9 + $0x18] sm:$0xff]
        %v1782 = vld [vmem:[#allocation9 + $0x20] sm:$0xf]
        %v1783 = vld [vmem:[#allocation9 + $0x24] sm:$0xff]
        %v1784 = vld [vmem:[#allocation9 + $0x2c] sm:$0xf]
        %v1785 = vld [vmem:[#allocation9 + $0x30] sm:$0xff]
        %v1786 = vld [vmem:[#allocation9 + $0x38] sm:$0xf]
        %v1787 = vld [vmem:[#allocation9 + $0x3c] sm:$0xff]
        %v1788 = vld [vmem:[#allocation9 + $0x44] sm:$0xf]
        %v1789 = vld [vmem:[#allocation9 + $0x48] sm:$0xff]
        %v1790 = vld [vmem:[#allocation9 + $0x50] sm:$0xf]
        %v1791 = vld [vmem:[#allocation9 + $0x54] sm:$0xff]
        %v1792 = vld [vmem:[#allocation9 + $0x5c] sm:$0xf]
        %v1793 = vld [vmem:[#allocation9 + $0x60] sm:$0xff]
        %v1794 = vld [vmem:[#allocation9 + $0x68] sm:$0xf]
        %v1795 = vld [vmem:[#allocation9 + $0x6c] sm:$0xff]
        %v1796 = vld [vmem:[#allocation9 + $0x74] sm:$0xf]
        %v1797 = vld [vmem:[#allocation9 + $0x78] sm:$0xff]
        %v1798 = vld [vmem:[#allocation9 + $0x80] sm:$0xf]
        %v1799 = vld [vmem:[#allocation9 + $0x84] sm:$0xff]
        %v1800 = vld [vmem:[#allocation9 + $0x8c] sm:$0xf]
        %v1801 = vld [vmem:[#allocation9 + $0x90] sm:$0xff]
        %v1802 = vld [vmem:[#allocation9 + $0x98] sm:$0xf]
        %v1803 = vld [vmem:[#allocation9 + $0x9c] sm:$0xff]
        %v1804 = vld [vmem:[#allocation9 + $0xa4] sm:$0xf]
        %v1805 = vld [vmem:[#allocation9 + $0xa8] sm:$0xff]
        %v1806 = vld [vmem:[#allocation9 + $0xb0] sm:$0xf]
        %v1807 = vld [vmem:[#allocation9 + $0xb4] sm:$0xff]
        %v1808 = vld [vmem:[#allocation9 + $0xbc] sm:$0xf]
        %v1841 = vunpack.c.l.b16 %v1777
        %v1842 = vunpack.c.h.b16 %v1777
        %v1843 = vunpack.c.l.b16 %v1778
        %v1844 = vunpack.c.l.b16 %v1779
        %v1845 = vunpack.c.h.b16 %v1779
        %v1846 = vunpack.c.l.b16 %v1780
        %v1847 = vunpack.c.l.b16 %v1781
        %v1848 = vunpack.c.h.b16 %v1781
        %v1849 = vunpack.c.l.b16 %v1782
        %v1850 = vunpack.c.l.b16 %v1783
        %v1851 = vunpack.c.h.b16 %v1783
        %v1852 = vunpack.c.l.b16 %v1784
        %v1853 = vunpack.c.l.b16 %v1785
        %v1854 = vunpack.c.h.b16 %v1785
        %v1855 = vunpack.c.l.b16 %v1786
        %v1856 = vunpack.c.l.b16 %v1787
        %v1857 = vunpack.c.h.b16 %v1787
        %v1858 = vunpack.c.l.b16 %v1788
        %v1859 = vunpack.c.l.b16 %v1789
        %v1860 = vunpack.c.h.b16 %v1789
        %v1861 = vunpack.c.l.b16 %v1790
        %v1862 = vunpack.c.l.b16 %v1791
        %v1863 = vunpack.c.h.b16 %v1791
        %v1864 = vunpack.c.l.b16 %v1792
        %v1865 = vunpack.c.l.b16 %v1793
        %v1866 = vunpack.c.h.b16 %v1793
        %v1867 = vunpack.c.l.b16 %v1794
        %v1868 = vunpack.c.l.b16 %v1795
        %v1869 = vunpack.c.h.b16 %v1795
        %v1870 = vunpack.c.l.b16 %v1796
        %v1871 = vunpack.c.l.b16 %v1797
        %v1872 = vunpack.c.h.b16 %v1797
        %v1873 = vunpack.c.l.b16 %v1798
        %v1874 = vunpack.c.l.b16 %v1799
        %v1875 = vunpack.c.h.b16 %v1799
        %v1876 = vunpack.c.l.b16 %v1800
        %v1877 = vunpack.c.l.b16 %v1801
        %v1878 = vunpack.c.h.b16 %v1801
        %v1879 = vunpack.c.l.b16 %v1802
        %v1880 = vunpack.c.l.b16 %v1803
        %v1881 = vunpack.c.h.b16 %v1803
        %v1882 = vunpack.c.l.b16 %v1804
        %v1883 = vunpack.c.l.b16 %v1805
        %v1884 = vunpack.c.h.b16 %v1805
        %v1885 = vunpack.c.l.b16 %v1806
        %v1886 = vunpack.c.l.b16 %v1807
        %v1887 = vunpack.c.h.b16 %v1807
        %v1888 = vunpack.c.l.b16 %v1808
        %v1889 = vpack.c.b16 %v1844, %v1841
        %v1890 = vpack.c.b16 %v1845, %v1842
        %v1891 = vpack.c.b16 %v1846, %v1843
        %v1892 = vpack.c.b16 %v1850, %v1847
        %v1893 = vpack.c.b16 %v1851, %v1848
        %v1894 = vpack.c.b16 %v1852, %v1849
        %v1895 = vpack.c.b16 %v1856, %v1853
        %v1896 = vpack.c.b16 %v1857, %v1854
        %v1897 = vpack.c.b16 %v1858, %v1855
        %v1898 = vpack.c.b16 %v1862, %v1859
        %v1899 = vpack.c.b16 %v1863, %v1860
        %v1900 = vpack.c.b16 %v1864, %v1861
        %v1901 = vpack.c.b16 %v1868, %v1865
        %v1902 = vpack.c.b16 %v1869, %v1866
        %v1903 = vpack.c.b16 %v1870, %v1867
        %v1904 = vpack.c.b16 %v1874, %v1871
        %v1905 = vpack.c.b16 %v1875, %v1872
        %v1906 = vpack.c.b16 %v1876, %v1873
        %v1907 = vpack.c.b16 %v1880, %v1877
        %v1908 = vpack.c.b16 %v1881, %v1878
        %v1909 = vpack.c.b16 %v1882, %v1879
        %v1910 = vpack.c.b16 %v1886, %v1883
        %v1911 = vpack.c.b16 %v1887, %v1884
        %v1912 = vpack.c.b16 %v1888, %v1885
        %1937 = vmatprep.subr.bf16.mxu0 %v1890
        %1938 = vmatpush1.bf16.msra.mxu0 %v1889
        %1939 = vmatprep.subr.bf16.mxu0 %v1893
        %1940 = vmatpush1.bf16.msra.mxu0 %v1892
        %1941 = vmatprep.subr.bf16.mxu0 %v1896
        %1942 = vmatpush1.bf16.msra.mxu0 %v1895
        %1943 = vmatprep.subr.bf16.mxu0 %v1899
        %1944 = vmatpush1.bf16.msra.mxu0 %v1898
        %1945 = vmatprep.subr.bf16.mxu0 %v1902
        %1946 = vmatpush1.bf16.msra.mxu0 %v1901
        %1947 = vmatprep.subr.bf16.mxu0 %v1905
        %1948 = vmatpush1.bf16.msra.mxu0 %v1904
        %1949 = vmatprep.subr.bf16.mxu0 %v1908
        %1950 = vmatpush1.bf16.msra.mxu0 %v1907
        %1951 = vmatprep.subr.bf16.mxu0 %v1911
        %1952 = vmatpush1.bf16.msra.mxu0 %v1910
        %1953 = vmatprep.subr.bf16.mxu0 0
        %1954 = vmatpush1.bf16.msra.mxu0 0
        %1955 = vmatprep.subr.bf16.mxu0 0
        %1956 = vmatpush1.bf16.msra.mxu0 0
        %1957 = vmatprep.subr.bf16.mxu0 0
        %1958 = vmatpush1.bf16.msra.mxu0 0
        %1959 = vmatprep.subr.bf16.mxu0 0
        %1960 = vmatpush1.bf16.msra.mxu0 0
        %1961 = vmatprep.subr.bf16.mxu0 0
        %1962 = vmatpush1.bf16.msra.mxu0 0
        %1963 = vmatprep.subr.bf16.mxu0 0
        %1964 = vmatpush1.bf16.msra.mxu0 0
        %1965 = vmatprep.subr.bf16.mxu0 0
        %1966 = vmatpush1.bf16.msra.mxu0 0
        %1967 = vmatprep.subr.bf16.mxu0 0
        %1968 = vmatpush1.bf16.msra.mxu0 0
        %1969 = vmatprep.mubr.bf16.mxu0 0
        %1970 = vmatmul.mubr.bf16.gmra.mrb[0].mxu0 %v1776
        %v1971 = vpop.f32.mrb[0].mxu0
        %v1972 = vadd.f32 0.0, %v1971
        %v1973 = vpop.f32.mrb[0].mxu0
        %v1974 = vadd.f32 0.0, %v1973
        %v1975 = vpop.f32.mrb[0].mxu0
        %v1976 = vpop.f32.mrb[0].mxu0
        %1977 = vdwg.mxu0
        %1978 = vmatprep.subr.bf16.mxu0 0
        %1979 = vmatpush1.bf16.msra.mxu0 %v1891
        %1980 = vmatprep.subr.bf16.mxu0 0
        %1981 = vmatpush1.bf16.msra.mxu0 %v1894
        %1982 = vmatprep.subr.bf16.mxu0 0
        %1983 = vmatpush1.bf16.msra.mxu0 %v1897
        %1984 = vmatprep.subr.bf16.mxu0 0
        %1985 = vmatpush1.bf16.msra.mxu0 %v1900
        %1986 = vmatprep.subr.bf16.mxu0 0
        %1987 = vmatpush1.bf16.msra.mxu0 %v1903
        %1988 = vmatprep.subr.bf16.mxu0 0
        %1989 = vmatpush1.bf16.msra.mxu0 %v1906
        %1990 = vmatprep.subr.bf16.mxu0 0
        %1991 = vmatpush1.bf16.msra.mxu0 %v1909
        %1992 = vmatprep.subr.bf16.mxu0 0
        %1993 = vmatpush1.bf16.msra.mxu0 %v1912
        %1994 = vmatprep.subr.bf16.mxu0 0
        %1995 = vmatpush1.bf16.msra.mxu0 0
        %1996 = vmatprep.subr.bf16.mxu0 0
        %1997 = vmatpush1.bf16.msra.mxu0 0
        %1998 = vmatprep.subr.bf16.mxu0 0
        %1999 = vmatpush1.bf16.msra.mxu0 0
        %2000 = vmatprep.subr.bf16.mxu0 0
        %2001 = vmatpush1.bf16.msra.mxu0 0
        %2002 = vmatprep.subr.bf16.mxu0 0
        %2003 = vmatpush1.bf16.msra.mxu0 0
        %2004 = vmatprep.subr.bf16.mxu0 0
        %2005 = vmatpush1.bf16.msra.mxu0 0
        %2006 = vmatprep.subr.bf16.mxu0 0
        %2007 = vmatpush1.bf16.msra.mxu0 0
        %2008 = vmatprep.subr.bf16.mxu0 0
        %2009 = vmatpush1.bf16.msra.mxu0 0
        %2010 = vmatprep.mubr.bf16.mxu0 0
        %2011 = vmatmul.mubr.bf16.gmra.mrb[0].mxu0 %v1776
        %v2012 = vpop.f32.mrb[0].mxu0
        %v2013 = vadd.f32 0.0, %v2012
        %v2014 = vpop.f32.mrb[0].mxu0
        %v2015 = vpop.f32.mrb[0].mxu0
        %v2016 = vpop.f32.mrb[0].mxu0
        %2017 = vdwg.mxu0
        %v2018 = vadd.f32 %v1775, %v1972
        %v2019 = vxor.u32 %v2018, 2147483648
        %v2020 = vmul.f32 %v2019, 1.442695
        %v2021 = vpow.pop %v2020
        %v2022 = vadd.f32 %v2021, 1.0
        %v2023 = vrcp.pop %v2022
        %v2024 = vmul.f32 1.0, %v2023
        %v2026 = vrot.slane %v1775, 1
        %v2028 = vadd.f32 %v2026, %v1974
        %v2029 = vxor.u32 %v2028, 2147483648
        %v2030 = vmul.f32 %v2029, 1.442695
        %v2031 = vpow.pop %v2030
        %v2032 = vadd.f32 %v2031, 1.0
        %v2033 = vrcp.pop %v2032
        %v2034 = vmul.f32 1.0, %v2033
        %v2035 = vadd.f32 %v2013, %v418
        %v2036 = vmul.f32 %v2024, %v2035
        %v2037 = vrot.slane %v1775, 2
        %v2039 = vadd.f32 %v2037, %v2036
        %v2040 = vtanh.pop %v2039
        %v2041 = vsub.f32 %v1772, %v2040
        %v2042 = vmul.f32 %v2034, %v2041
        %v2043 = vadd.f32 %v2040, %v2042
        %2044 = vst [vmem:[%s285 + $0x5] sm:$0x1] %v2043
        %s2045 = scalar_lea.vmem [#allocation3], 6
        %v2046 = vld [vmem:[%s2045] ss:$8 sm:$0x7]
        %v2047 = vpack.c.bf16 %v2043, %v2043
        %v2048 = vld [vmem:[#allocation9] sm:$0xff]
        %v2049 = vld [vmem:[#allocation9 + $0x8] sm:$0xf]
        %v2050 = vld [vmem:[#allocation9 + $0xc] sm:$0xff]
        %v2051 = vld [vmem:[#allocation9 + $0x14] sm:$0xf]
        %v2052 = vld [vmem:[#allocation9 + $0x18] sm:$0xff]
        %v2053 = vld [vmem:[#allocation9 + $0x20] sm:$0xf]
        %v2054 = vld [vmem:[#allocation9 + $0x24] sm:$0xff]
        %v2055 = vld [vmem:[#allocation9 + $0x2c] sm:$0xf]
        %v2056 = vld [vmem:[#allocation9 + $0x30] sm:$0xff]
        %v2057 = vld [vmem:[#allocation9 + $0x38] sm:$0xf]
        %v2058 = vld [vmem:[#allocation9 + $0x3c] sm:$0xff]
        %v2059 = vld [vmem:[#allocation9 + $0x44] sm:$0xf]
        %v2060 = vld [vmem:[#allocation9 + $0x48] sm:$0xff]
        %v2061 = vld [vmem:[#allocation9 + $0x50] sm:$0xf]
        %v2062 = vld [vmem:[#allocation9 + $0x54] sm:$0xff]
        %v2063 = vld [vmem:[#allocation9 + $0x5c] sm:$0xf]
        %v2064 = vld [vmem:[#allocation9 + $0x60] sm:$0xff]
        %v2065 = vld [vmem:[#allocation9 + $0x68] sm:$0xf]
        %v2066 = vld [vmem:[#allocation9 + $0x6c] sm:$0xff]
        %v2067 = vld [vmem:[#allocation9 + $0x74] sm:$0xf]
        %v2068 = vld [vmem:[#allocation9 + $0x78] sm:$0xff]
        %v2069 = vld [vmem:[#allocation9 + $0x80] sm:$0xf]
        %v2070 = vld [vmem:[#allocation9 + $0x84] sm:$0xff]
        %v2071 = vld [vmem:[#allocation9 + $0x8c] sm:$0xf]
        %v2072 = vld [vmem:[#allocation9 + $0x90] sm:$0xff]
        %v2073 = vld [vmem:[#allocation9 + $0x98] sm:$0xf]
        %v2074 = vld [vmem:[#allocation9 + $0x9c] sm:$0xff]
        %v2075 = vld [vmem:[#allocation9 + $0xa4] sm:$0xf]
        %v2076 = vld [vmem:[#allocation9 + $0xa8] sm:$0xff]
        %v2077 = vld [vmem:[#allocation9 + $0xb0] sm:$0xf]
        %v2078 = vld [vmem:[#allocation9 + $0xb4] sm:$0xff]
        %v2079 = vld [vmem:[#allocation9 + $0xbc] sm:$0xf]
        %v2112 = vunpack.c.l.b16 %v2048
        %v2113 = vunpack.c.h.b16 %v2048
        %v2114 = vunpack.c.l.b16 %v2049
        %v2115 = vunpack.c.l.b16 %v2050
        %v2116 = vunpack.c.h.b16 %v2050
        %v2117 = vunpack.c.l.b16 %v2051
        %v2118 = vunpack.c.l.b16 %v2052
        %v2119 = vunpack.c.h.b16 %v2052
        %v2120 = vunpack.c.l.b16 %v2053
        %v2121 = vunpack.c.l.b16 %v2054
        %v2122 = vunpack.c.h.b16 %v2054
        %v2123 = vunpack.c.l.b16 %v2055
        %v2124 = vunpack.c.l.b16 %v2056
        %v2125 = vunpack.c.h.b16 %v2056
        %v2126 = vunpack.c.l.b16 %v2057
        %v2127 = vunpack.c.l.b16 %v2058
        %v2128 = vunpack.c.h.b16 %v2058
        %v2129 = vunpack.c.l.b16 %v2059
        %v2130 = vunpack.c.l.b16 %v2060
        %v2131 = vunpack.c.h.b16 %v2060
        %v2132 = vunpack.c.l.b16 %v2061
        %v2133 = vunpack.c.l.b16 %v2062
        %v2134 = vunpack.c.h.b16 %v2062
        %v2135 = vunpack.c.l.b16 %v2063
        %v2136 = vunpack.c.l.b16 %v2064
        %v2137 = vunpack.c.h.b16 %v2064
        %v2138 = vunpack.c.l.b16 %v2065
        %v2139 = vunpack.c.l.b16 %v2066
        %v2140 = vunpack.c.h.b16 %v2066
        %v2141 = vunpack.c.l.b16 %v2067
        %v2142 = vunpack.c.l.b16 %v2068
        %v2143 = vunpack.c.h.b16 %v2068
        %v2144 = vunpack.c.l.b16 %v2069
        %v2145 = vunpack.c.l.b16 %v2070
        %v2146 = vunpack.c.h.b16 %v2070
        %v2147 = vunpack.c.l.b16 %v2071
        %v2148 = vunpack.c.l.b16 %v2072
        %v2149 = vunpack.c.h.b16 %v2072
        %v2150 = vunpack.c.l.b16 %v2073
        %v2151 = vunpack.c.l.b16 %v2074
        %v2152 = vunpack.c.h.b16 %v2074
        %v2153 = vunpack.c.l.b16 %v2075
        %v2154 = vunpack.c.l.b16 %v2076
        %v2155 = vunpack.c.h.b16 %v2076
        %v2156 = vunpack.c.l.b16 %v2077
        %v2157 = vunpack.c.l.b16 %v2078
        %v2158 = vunpack.c.h.b16 %v2078
        %v2159 = vunpack.c.l.b16 %v2079
        %v2160 = vpack.c.b16 %v2115, %v2112
        %v2161 = vpack.c.b16 %v2116, %v2113
        %v2162 = vpack.c.b16 %v2117, %v2114
        %v2163 = vpack.c.b16 %v2121, %v2118
        %v2164 = vpack.c.b16 %v2122, %v2119
        %v2165 = vpack.c.b16 %v2123, %v2120
        %v2166 = vpack.c.b16 %v2127, %v2124
        %v2167 = vpack.c.b16 %v2128, %v2125
        %v2168 = vpack.c.b16 %v2129, %v2126
        %v2169 = vpack.c.b16 %v2133, %v2130
        %v2170 = vpack.c.b16 %v2134, %v2131
        %v2171 = vpack.c.b16 %v2135, %v2132
        %v2172 = vpack.c.b16 %v2139, %v2136
        %v2173 = vpack.c.b16 %v2140, %v2137
        %v2174 = vpack.c.b16 %v2141, %v2138
        %v2175 = vpack.c.b16 %v2145, %v2142
        %v2176 = vpack.c.b16 %v2146, %v2143
        %v2177 = vpack.c.b16 %v2147, %v2144
        %v2178 = vpack.c.b16 %v2151, %v2148
        %v2179 = vpack.c.b16 %v2152, %v2149
        %v2180 = vpack.c.b16 %v2153, %v2150
        %v2181 = vpack.c.b16 %v2157, %v2154
        %v2182 = vpack.c.b16 %v2158, %v2155
        %v2183 = vpack.c.b16 %v2159, %v2156
        %2208 = vmatprep.subr.bf16.mxu0 %v2161
        %2209 = vmatpush1.bf16.msra.mxu0 %v2160
        %2210 = vmatprep.subr.bf16.mxu0 %v2164
        %2211 = vmatpush1.bf16.msra.mxu0 %v2163
        %2212 = vmatprep.subr.bf16.mxu0 %v2167
        %2213 = vmatpush1.bf16.msra.mxu0 %v2166
        %2214 = vmatprep.subr.bf16.mxu0 %v2170
        %2215 = vmatpush1.bf16.msra.mxu0 %v2169
        %2216 = vmatprep.subr.bf16.mxu0 %v2173
        %2217 = vmatpush1.bf16.msra.mxu0 %v2172
        %2218 = vmatprep.subr.bf16.mxu0 %v2176
        %2219 = vmatpush1.bf16.msra.mxu0 %v2175
        %2220 = vmatprep.subr.bf16.mxu0 %v2179
        %2221 = vmatpush1.bf16.msra.mxu0 %v2178
        %2222 = vmatprep.subr.bf16.mxu0 %v2182
        %2223 = vmatpush1.bf16.msra.mxu0 %v2181
        %2224 = vmatprep.subr.bf16.mxu0 0
        %2225 = vmatpush1.bf16.msra.mxu0 0
        %2226 = vmatprep.subr.bf16.mxu0 0
        %2227 = vmatpush1.bf16.msra.mxu0 0
        %2228 = vmatprep.subr.bf16.mxu0 0
        %2229 = vmatpush1.bf16.msra.mxu0 0
        %2230 = vmatprep.subr.bf16.mxu0 0
        %2231 = vmatpush1.bf16.msra.mxu0 0
        %2232 = vmatprep.subr.bf16.mxu0 0
        %2233 = vmatpush1.bf16.msra.mxu0 0
        %2234 = vmatprep.subr.bf16.mxu0 0
        %2235 = vmatpush1.bf16.msra.mxu0 0
        %2236 = vmatprep.subr.bf16.mxu0 0
        %2237 = vmatpush1.bf16.msra.mxu0 0
        %2238 = vmatprep.subr.bf16.mxu0 0
        %2239 = vmatpush1.bf16.msra.mxu0 0
        %2240 = vmatprep.mubr.bf16.mxu0 0
        %2241 = vmatmul.mubr.bf16.gmra.mrb[0].mxu0 %v2047
        %v2242 = vpop.f32.mrb[0].mxu0
        %v2243 = vadd.f32 0.0, %v2242
        %v2244 = vpop.f32.mrb[0].mxu0
        %v2245 = vadd.f32 0.0, %v2244
        %v2246 = vpop.f32.mrb[0].mxu0
        %v2247 = vpop.f32.mrb[0].mxu0
        %2248 = vdwg.mxu0
        %2249 = vmatprep.subr.bf16.mxu0 0
        %2250 = vmatpush1.bf16.msra.mxu0 %v2162
        %2251 = vmatprep.subr.bf16.mxu0 0
        %2252 = vmatpush1.bf16.msra.mxu0 %v2165
        %2253 = vmatprep.subr.bf16.mxu0 0
        %2254 = vmatpush1.bf16.msra.mxu0 %v2168
        %2255 = vmatprep.subr.bf16.mxu0 0
        %2256 = vmatpush1.bf16.msra.mxu0 %v2171
        %2257 = vmatprep.subr.bf16.mxu0 0
        %2258 = vmatpush1.bf16.msra.mxu0 %v2174
        %2259 = vmatprep.subr.bf16.mxu0 0
        %2260 = vmatpush1.bf16.msra.mxu0 %v2177
        %2261 = vmatprep.subr.bf16.mxu0 0
        %2262 = vmatpush1.bf16.msra.mxu0 %v2180
        %2263 = vmatprep.subr.bf16.mxu0 0
        %2264 = vmatpush1.bf16.msra.mxu0 %v2183
        %2265 = vmatprep.subr.bf16.mxu0 0
        %2266 = vmatpush1.bf16.msra.mxu0 0
        %2267 = vmatprep.subr.bf16.mxu0 0
        %2268 = vmatpush1.bf16.msra.mxu0 0
        %2269 = vmatprep.subr.bf16.mxu0 0
        %2270 = vmatpush1.bf16.msra.mxu0 0
        %2271 = vmatprep.subr.bf16.mxu0 0
        %2272 = vmatpush1.bf16.msra.mxu0 0
        %2273 = vmatprep.subr.bf16.mxu0 0
        %2274 = vmatpush1.bf16.msra.mxu0 0
        %2275 = vmatprep.subr.bf16.mxu0 0
        %2276 = vmatpush1.bf16.msra.mxu0 0
        %2277 = vmatprep.subr.bf16.mxu0 0
        %2278 = vmatpush1.bf16.msra.mxu0 0
        %2279 = vmatprep.subr.bf16.mxu0 0
        %2280 = vmatpush1.bf16.msra.mxu0 0
        %2281 = vmatprep.mubr.bf16.mxu0 0
        %2282 = vmatmul.mubr.bf16.gmra.mrb[0].mxu0 %v2047
        %v2283 = vpop.f32.mrb[0].mxu0
        %v2284 = vadd.f32 0.0, %v2283
        %v2285 = vpop.f32.mrb[0].mxu0
        %v2286 = vpop.f32.mrb[0].mxu0
        %v2287 = vpop.f32.mrb[0].mxu0
        %2288 = vdwg.mxu0
        %v2289 = vadd.f32 %v2046, %v2243
        %v2290 = vxor.u32 %v2289, 2147483648
        %v2291 = vmul.f32 %v2290, 1.442695
        %v2292 = vpow.pop %v2291
        %v2293 = vadd.f32 %v2292, 1.0
        %v2294 = vrcp.pop %v2293
        %v2295 = vmul.f32 1.0, %v2294
        %v2297 = vrot.slane %v2046, 1
        %v2299 = vadd.f32 %v2297, %v2245
        %v2300 = vxor.u32 %v2299, 2147483648
        %v2301 = vmul.f32 %v2300, 1.442695
        %v2302 = vpow.pop %v2301
        %v2303 = vadd.f32 %v2302, 1.0
        %v2304 = vrcp.pop %v2303
        %v2305 = vmul.f32 1.0, %v2304
        %v2306 = vadd.f32 %v2284, %v418
        %v2307 = vmul.f32 %v2295, %v2306
        %v2308 = vrot.slane %v2046, 2
        %v2310 = vadd.f32 %v2308, %v2307
        %v2311 = vtanh.pop %v2310
        %v2312 = vsub.f32 %v2043, %v2311
        %v2313 = vmul.f32 %v2305, %v2312
        %v2314 = vadd.f32 %v2311, %v2313
        %2315 = vst [vmem:[%s285 + $0x6] sm:$0x1] %v2314
        %s2316 = scalar_lea.vmem [#allocation3], 7
        %v2317 = vld [vmem:[%s2316] ss:$8 sm:$0x7]
        %v2318 = vpack.c.bf16 %v2314, %v2314
        %v2319 = vld [vmem:[#allocation9] sm:$0xff]
        %v2320 = vld [vmem:[#allocation9 + $0x8] sm:$0xf]
        %v2321 = vld [vmem:[#allocation9 + $0xc] sm:$0xff]
        %v2322 = vld [vmem:[#allocation9 + $0x14] sm:$0xf]
        %v2323 = vld [vmem:[#allocation9 + $0x18] sm:$0xff]
        %v2324 = vld [vmem:[#allocation9 + $0x20] sm:$0xf]
        %v2325 = vld [vmem:[#allocation9 + $0x24] sm:$0xff]
        %v2326 = vld [vmem:[#allocation9 + $0x2c] sm:$0xf]
        %v2327 = vld [vmem:[#allocation9 + $0x30] sm:$0xff]
        %v2328 = vld [vmem:[#allocation9 + $0x38] sm:$0xf]
        %v2329 = vld [vmem:[#allocation9 + $0x3c] sm:$0xff]
        %v2330 = vld [vmem:[#allocation9 + $0x44] sm:$0xf]
        %v2331 = vld [vmem:[#allocation9 + $0x48] sm:$0xff]
        %v2332 = vld [vmem:[#allocation9 + $0x50] sm:$0xf]
        %v2333 = vld [vmem:[#allocation9 + $0x54] sm:$0xff]
        %v2334 = vld [vmem:[#allocation9 + $0x5c] sm:$0xf]
        %v2335 = vld [vmem:[#allocation9 + $0x60] sm:$0xff]
        %v2336 = vld [vmem:[#allocation9 + $0x68] sm:$0xf]
        %v2337 = vld [vmem:[#allocation9 + $0x6c] sm:$0xff]
        %v2338 = vld [vmem:[#allocation9 + $0x74] sm:$0xf]
        %v2339 = vld [vmem:[#allocation9 + $0x78] sm:$0xff]
        %v2340 = vld [vmem:[#allocation9 + $0x80] sm:$0xf]
        %v2341 = vld [vmem:[#allocation9 + $0x84] sm:$0xff]
        %v2342 = vld [vmem:[#allocation9 + $0x8c] sm:$0xf]
        %v2343 = vld [vmem:[#allocation9 + $0x90] sm:$0xff]
        %v2344 = vld [vmem:[#allocation9 + $0x98] sm:$0xf]
        %v2345 = vld [vmem:[#allocation9 + $0x9c] sm:$0xff]
        %v2346 = vld [vmem:[#allocation9 + $0xa4] sm:$0xf]
        %v2347 = vld [vmem:[#allocation9 + $0xa8] sm:$0xff]
        %v2348 = vld [vmem:[#allocation9 + $0xb0] sm:$0xf]
        %v2349 = vld [vmem:[#allocation9 + $0xb4] sm:$0xff]
        %v2350 = vld [vmem:[#allocation9 + $0xbc] sm:$0xf]
        %v2383 = vunpack.c.l.b16 %v2319
        %v2384 = vunpack.c.h.b16 %v2319
        %v2385 = vunpack.c.l.b16 %v2320
        %v2386 = vunpack.c.l.b16 %v2321
        %v2387 = vunpack.c.h.b16 %v2321
        %v2388 = vunpack.c.l.b16 %v2322
        %v2389 = vunpack.c.l.b16 %v2323
        %v2390 = vunpack.c.h.b16 %v2323
        %v2391 = vunpack.c.l.b16 %v2324
        %v2392 = vunpack.c.l.b16 %v2325
        %v2393 = vunpack.c.h.b16 %v2325
        %v2394 = vunpack.c.l.b16 %v2326
        %v2395 = vunpack.c.l.b16 %v2327
        %v2396 = vunpack.c.h.b16 %v2327
        %v2397 = vunpack.c.l.b16 %v2328
        %v2398 = vunpack.c.l.b16 %v2329
        %v2399 = vunpack.c.h.b16 %v2329
        %v2400 = vunpack.c.l.b16 %v2330
        %v2401 = vunpack.c.l.b16 %v2331
        %v2402 = vunpack.c.h.b16 %v2331
        %v2403 = vunpack.c.l.b16 %v2332
        %v2404 = vunpack.c.l.b16 %v2333
        %v2405 = vunpack.c.h.b16 %v2333
        %v2406 = vunpack.c.l.b16 %v2334
        %v2407 = vunpack.c.l.b16 %v2335
        %v2408 = vunpack.c.h.b16 %v2335
        %v2409 = vunpack.c.l.b16 %v2336
        %v2410 = vunpack.c.l.b16 %v2337
        %v2411 = vunpack.c.h.b16 %v2337
        %v2412 = vunpack.c.l.b16 %v2338
        %v2413 = vunpack.c.l.b16 %v2339
        %v2414 = vunpack.c.h.b16 %v2339
        %v2415 = vunpack.c.l.b16 %v2340
        %v2416 = vunpack.c.l.b16 %v2341
        %v2417 = vunpack.c.h.b16 %v2341
        %v2418 = vunpack.c.l.b16 %v2342
        %v2419 = vunpack.c.l.b16 %v2343
        %v2420 = vunpack.c.h.b16 %v2343
        %v2421 = vunpack.c.l.b16 %v2344
        %v2422 = vunpack.c.l.b16 %v2345
        %v2423 = vunpack.c.h.b16 %v2345
        %v2424 = vunpack.c.l.b16 %v2346
        %v2425 = vunpack.c.l.b16 %v2347
        %v2426 = vunpack.c.h.b16 %v2347
        %v2427 = vunpack.c.l.b16 %v2348
        %v2428 = vunpack.c.l.b16 %v2349
        %v2429 = vunpack.c.h.b16 %v2349
        %v2430 = vunpack.c.l.b16 %v2350
        %v2431 = vpack.c.b16 %v2386, %v2383
        %v2432 = vpack.c.b16 %v2387, %v2384
        %v2433 = vpack.c.b16 %v2388, %v2385
        %v2434 = vpack.c.b16 %v2392, %v2389
        %v2435 = vpack.c.b16 %v2393, %v2390
        %v2436 = vpack.c.b16 %v2394, %v2391
        %v2437 = vpack.c.b16 %v2398, %v2395
        %v2438 = vpack.c.b16 %v2399, %v2396
        %v2439 = vpack.c.b16 %v2400, %v2397
        %v2440 = vpack.c.b16 %v2404, %v2401
        %v2441 = vpack.c.b16 %v2405, %v2402
        %v2442 = vpack.c.b16 %v2406, %v2403
        %v2443 = vpack.c.b16 %v2410, %v2407
        %v2444 = vpack.c.b16 %v2411, %v2408
        %v2445 = vpack.c.b16 %v2412, %v2409
        %v2446 = vpack.c.b16 %v2416, %v2413
        %v2447 = vpack.c.b16 %v2417, %v2414
        %v2448 = vpack.c.b16 %v2418, %v2415
        %v2449 = vpack.c.b16 %v2422, %v2419
        %v2450 = vpack.c.b16 %v2423, %v2420
        %v2451 = vpack.c.b16 %v2424, %v2421
        %v2452 = vpack.c.b16 %v2428, %v2425
        %v2453 = vpack.c.b16 %v2429, %v2426
        %v2454 = vpack.c.b16 %v2430, %v2427
        %2479 = vmatprep.subr.bf16.mxu0 %v2432
        %2480 = vmatpush1.bf16.msra.mxu0 %v2431
        %2481 = vmatprep.subr.bf16.mxu0 %v2435
        %2482 = vmatpush1.bf16.msra.mxu0 %v2434
        %2483 = vmatprep.subr.bf16.mxu0 %v2438
        %2484 = vmatpush1.bf16.msra.mxu0 %v2437
        %2485 = vmatprep.subr.bf16.mxu0 %v2441
        %2486 = vmatpush1.bf16.msra.mxu0 %v2440
        %2487 = vmatprep.subr.bf16.mxu0 %v2444
        %2488 = vmatpush1.bf16.msra.mxu0 %v2443
        %2489 = vmatprep.subr.bf16.mxu0 %v2447
        %2490 = vmatpush1.bf16.msra.mxu0 %v2446
        %2491 = vmatprep.subr.bf16.mxu0 %v2450
        %2492 = vmatpush1.bf16.msra.mxu0 %v2449
        %2493 = vmatprep.subr.bf16.mxu0 %v2453
        %2494 = vmatpush1.bf16.msra.mxu0 %v2452
        %2495 = vmatprep.subr.bf16.mxu0 0
        %2496 = vmatpush1.bf16.msra.mxu0 0
        %2497 = vmatprep.subr.bf16.mxu0 0
        %2498 = vmatpush1.bf16.msra.mxu0 0
        %2499 = vmatprep.subr.bf16.mxu0 0
        %2500 = vmatpush1.bf16.msra.mxu0 0
        %2501 = vmatprep.subr.bf16.mxu0 0
        %2502 = vmatpush1.bf16.msra.mxu0 0
        %2503 = vmatprep.subr.bf16.mxu0 0
        %2504 = vmatpush1.bf16.msra.mxu0 0
        %2505 = vmatprep.subr.bf16.mxu0 0
        %2506 = vmatpush1.bf16.msra.mxu0 0
        %2507 = vmatprep.subr.bf16.mxu0 0
        %2508 = vmatpush1.bf16.msra.mxu0 0
        %2509 = vmatprep.subr.bf16.mxu0 0
        %2510 = vmatpush1.bf16.msra.mxu0 0
        %2511 = vmatprep.mubr.bf16.mxu0 0
        %2512 = vmatmul.mubr.bf16.gmra.mrb[0].mxu0 %v2318
        %v2513 = vpop.f32.mrb[0].mxu0
        %v2514 = vadd.f32 0.0, %v2513
        %v2515 = vpop.f32.mrb[0].mxu0
        %v2516 = vadd.f32 0.0, %v2515
        %v2517 = vpop.f32.mrb[0].mxu0
        %v2518 = vpop.f32.mrb[0].mxu0
        %2519 = vdwg.mxu0
        %2520 = vmatprep.subr.bf16.mxu0 0
        %2521 = vmatpush1.bf16.msra.mxu0 %v2433
        %2522 = vmatprep.subr.bf16.mxu0 0
        %2523 = vmatpush1.bf16.msra.mxu0 %v2436
        %2524 = vmatprep.subr.bf16.mxu0 0
        %2525 = vmatpush1.bf16.msra.mxu0 %v2439
        %2526 = vmatprep.subr.bf16.mxu0 0
        %2527 = vmatpush1.bf16.msra.mxu0 %v2442
        %2528 = vmatprep.subr.bf16.mxu0 0
        %2529 = vmatpush1.bf16.msra.mxu0 %v2445
        %2530 = vmatprep.subr.bf16.mxu0 0
        %2531 = vmatpush1.bf16.msra.mxu0 %v2448
        %2532 = vmatprep.subr.bf16.mxu0 0
        %2533 = vmatpush1.bf16.msra.mxu0 %v2451
        %2534 = vmatprep.subr.bf16.mxu0 0
        %2535 = vmatpush1.bf16.msra.mxu0 %v2454
        %2536 = vmatprep.subr.bf16.mxu0 0
        %2537 = vmatpush1.bf16.msra.mxu0 0
        %2538 = vmatprep.subr.bf16.mxu0 0
        %2539 = vmatpush1.bf16.msra.mxu0 0
        %2540 = vmatprep.subr.bf16.mxu0 0
        %2541 = vmatpush1.bf16.msra.mxu0 0
        %2542 = vmatprep.subr.bf16.mxu0 0
        %2543 = vmatpush1.bf16.msra.mxu0 0
        %2544 = vmatprep.subr.bf16.mxu0 0
        %2545 = vmatpush1.bf16.msra.mxu0 0
        %2546 = vmatprep.subr.bf16.mxu0 0
        %2547 = vmatpush1.bf16.msra.mxu0 0
        %2548 = vmatprep.subr.bf16.mxu0 0
        %2549 = vmatpush1.bf16.msra.mxu0 0
        %2550 = vmatprep.subr.bf16.mxu0 0
        %2551 = vmatpush1.bf16.msra.mxu0 0
        %2552 = vmatprep.mubr.bf16.mxu0 0
        %2553 = vmatmul.mubr.bf16.gmra.mrb[0].mxu0 %v2318
        %v2554 = vpop.f32.mrb[0].mxu0
        %v2555 = vadd.f32 0.0, %v2554
        %v2556 = vpop.f32.mrb[0].mxu0
        %v2557 = vpop.f32.mrb[0].mxu0
        %v2558 = vpop.f32.mrb[0].mxu0
        %2559 = vdwg.mxu0
        %v2560 = vadd.f32 %v2317, %v2514
        %v2561 = vxor.u32 %v2560, 2147483648
        %v2562 = vmul.f32 %v2561, 1.442695
        %v2563 = vpow.pop %v2562
        %v2564 = vadd.f32 %v2563, 1.0
        %v2565 = vrcp.pop %v2564
        %v2566 = vmul.f32 1.0, %v2565
        %v2568 = vrot.slane %v2317, 1
        %v2570 = vadd.f32 %v2568, %v2516
        %v2571 = vxor.u32 %v2570, 2147483648
        %v2572 = vmul.f32 %v2571, 1.442695
        %v2573 = vpow.pop %v2572
        %v2574 = vadd.f32 %v2573, 1.0
        %v2575 = vrcp.pop %v2574
        %v2576 = vmul.f32 1.0, %v2575
        %v2577 = vadd.f32 %v2555, %v418
        %v2578 = vmul.f32 %v2566, %v2577
        %v2579 = vrot.slane %v2317, 2
        %v2581 = vadd.f32 %v2579, %v2578
        %v2582 = vtanh.pop %v2581
        %v2583 = vsub.f32 %v2314, %v2582
        %v2584 = vmul.f32 %v2576, %v2583
        %v2585 = vadd.f32 %v2582, %v2584
        %2586 = vst [vmem:[%s285 + $0x7] sm:$0x1] %v2585
        %2587 = vst [vmem:[#allocation2] sm:$0x1] %v2585
        %s2588 = sand.u32 %s157, 1
        %s2589 = scalar_lea.sflag [#allocation6], %s2588
        %s2590 = sand.u32 %s157, 1
        %s2591 = smul.addr %s2590, 8
        %s2592 = scalar_lea.vmem [#allocation10], %s2591
        // Predicated region
        $region57: #{tpu_custom_call.1} parent=39 // pred_check
          %p2593 = pneg %p167
        $region58: #{tpu_custom_call.1} parent=39 // pred_check_branch
          %2595 = sbr.rel (%p2593) target = $region60
        $region59: #{tpu_custom_call.1} parent=39 // pred_region
          %s2597 = ssub.s32 128, 128
          %2598 = vsyncadd %s2589, %s2597
          %s2599 = sadd.s32 %s28, %s27
          %s2600 = smul.addr %s2599, 128
          %s2601 = scalar_lea.hbm %s5, %s2600
          %s2603 = sshll.u32 %s2592, 4
          %s2604 = int_to_ptr.vmem [resolvable:$true] %s2603
          %2606 = dma.vmem_to_hbm [thread:$0]  %s2604, 128, %s2601, %s2589
        $region60: #{tpu_custom_call.1} parent=39 // pred_fallthru
          _
      $region40: #{tpu_custom_call.1} parent=5 // pred_fallthru
        _
      %p2607 = scmp.le.s32.totalorder 2, %s18
      // Predicated region
      $region61: #{tpu_custom_call.1} parent=5 // pred_check
        %p2608 = pneg %p2607
      $region62: #{tpu_custom_call.1} parent=5 // pred_check_branch
        %2610 = sbr.rel (%p2608) target = $region64
      $region63: #{tpu_custom_call.1} parent=5 // pred_region
        %s2611 = ssub.s32 %s18, 2
        // Predicated region
        $region65: #{tpu_custom_call.1} parent=63 // pred_check
          %p2612 = pneg %p173
        $region66: #{tpu_custom_call.1} parent=63 // pred_check_branch
          %2614 = sbr.rel (%p2612) target = $region68
        $region67: #{tpu_custom_call.1} parent=63 // pred_region
          %s2615 = sand.u32 %s158, 1
          %s2616 = scalar_lea.sflag [#allocation6], %s2615
          %s2617 = sand.u32 %s158, 1
          %s2618 = smul.addr %s2617, 8
          %s2619 = scalar_lea.vmem [#allocation10], %s2618
          %2620 = dma.done %s2616, 128
        $region68: #{tpu_custom_call.1} parent=63 // pred_fallthru
          _
      $region64: #{tpu_custom_call.1} parent=5 // pred_fallthru
        _
    $region6: #{tpu_custom_call.1} parent=1 // loop_footer
      %s22 = sadd.s32 1, %s18
    $region7: #{tpu_custom_call.1} parent=1 // loop_footer_branch
      %17 = sbr.rel target = $region3
    $region8: #{tpu_custom_call.1} parent=1 // loop_exit
      _
    %2621 = vsyncpa [#allocation5], 1
    %s2622 = scalar_lea.sflag [#allocation5], 1
    %2623 = vsyncpa %s2622, 1
    %2624 = vsyncpa [#allocation8], 1
    %2625 = vsyncpa [#allocation6], 1
    %s2626 = scalar_lea.sflag [#allocation6], 1
    %2627 = vsyncpa %s2626, 1

</llo_original>
